<compile_context>
chip_gen: v6e
topology: v6e:2x2x1
jax: 0.10.0
libtpu: 0.0.40
codegen_flags: <defaults>
</compile_context>

<pallas_src>
import jax
import jax.numpy as jnp
from jax.experimental import pallas as pl
from jax.experimental.pallas import tpu as pltpu


def _round_up(x: int, m: int) -> int:
    return (x + m - 1) // m * m


def gcn_layer0_kernel(a_ref, din_ref, dout_ref, xw_ref, b1_ref, drop_ref, w2_ref, z_ref):
    """Z[rows] = d_out^{-1/2} * ( dropout(relu(d_in^{-1/2} * (A[rows] @ XWs) + b1)) @ W2 )."""
    a = a_ref[...].astype(jnp.bfloat16)                    # exact: A is binary int8
    agg = jnp.dot(a, xw_ref[...], preferred_element_type=jnp.float32)
    h1 = jnp.maximum(din_ref[...] * agg + b1_ref[...], 0.0)
    h1 = h1 * drop_ref[...].astype(jnp.float32)            # keep-mask * (1/keep_prob)
    z = jnp.dot(h1.astype(jnp.bfloat16), w2_ref[...],
                preferred_element_type=jnp.float32)
    z_ref[...] = (dout_ref[...] * z).astype(z_ref.dtype)   # pre-scale for layer-1 agg


def gcn_layer1_kernel(a_ref, din_ref, z_ref, b2_ref, o_ref):
    """Y[rows] = d_in^{-1/2} * (A[rows] @ Z) + b2."""
    a = a_ref[...].astype(jnp.bfloat16)
    agg = jnp.dot(a, z_ref[...], preferred_element_type=jnp.float32)
    o_ref[...] = (din_ref[...] * agg + b2_ref[...]).astype(o_ref.dtype)


def gcn_forward(adj, features, params, *, dropout_mask=None, training=True, tm=512):
    """Full GCN forward on a dense binary adjacency `adj` (0/1)."""
    w1, b1, w2, b2 = params
    n, f_in = features.shape
    hid = w1.shape[1]
    f_out = w2.shape[1]

    adj = adj.astype(jnp.float32)
    deg_in = jnp.maximum(adj.sum(axis=1), 1.0)     # DGL: degs.clamp(min=1)
    deg_out = jnp.maximum(adj.sum(axis=0), 1.0)
    din = 1.0 / jnp.sqrt(deg_in)
    dout = 1.0 / jnp.sqrt(deg_out)

    hid_pad = _round_up(hid, 128)
    out_pad = _round_up(f_out, 128)
    n_pad0 = _round_up(max(n, 8), 128)
    tm = max(128, min(_round_up(tm, 128), n_pad0))
    n_pad = _round_up(n_pad0, tm)
    nt = n_pad // tm

    # Binary adjacency streamed as int8 (exact); normalization factored out of A.
    a_p = jnp.zeros((n_pad, n_pad), jnp.int8).at[:n, :n].set(adj.astype(jnp.int8))
    din_p = jnp.zeros((n_pad, 1), jnp.float32).at[:n, 0].set(din)
    dout_p = jnp.zeros((n_pad, 1), jnp.float32).at[:n, 0].set(dout)

    # XWs = D_out^{-1/2} (X @ W1), computed once outside the kernel, resident bf16 operand.
    xw = (features.astype(jnp.float32) @ w1.astype(jnp.float32)) * dout[:, None]
    xw_p = jnp.zeros((n_pad, hid_pad), jnp.bfloat16).at[:n, :hid].set(xw.astype(jnp.bfloat16))
    b1_p = jnp.zeros((1, hid_pad), jnp.float32).at[:, :hid].set(jnp.reshape(b1, (1, hid)))
    w2_p = jnp.zeros((hid_pad, out_pad), jnp.bfloat16).at[:hid, :f_out].set(
        w2.astype(jnp.bfloat16))
    b2_p = jnp.zeros((1, out_pad), jnp.float32).at[:, :f_out].set(jnp.reshape(b2, (1, f_out)))

    if training:
        assert dropout_mask is not None, "training=True requires dropout_mask (keep * 1/p)"
        # 0.0 / 2.0 are exact in bf16; padded rows are 0 (they never contribute anyway).
        drop_p = jnp.zeros((n_pad, hid_pad), jnp.bfloat16).at[:n, :hid].set(
            dropout_mask.astype(jnp.bfloat16))
    else:
        drop_p = jnp.ones((n_pad, hid_pad), jnp.bfloat16)

    # ---------------- layer 0: Z = D_out^{-1/2} (dropout(relu(Ahat X W1 + b1)) @ W2) ----------------
    vmem_a = (2 * tm * n_pad                      # A row tile (int8), double-buffered
              + 4 * tm * 4                        # din / dout tiles, double-buffered
              + n_pad * hid_pad * 2               # XW resident (bf16)
              + hid_pad * 4                       # b1
              + 2 * tm * hid_pad * 2              # dropout tile (bf16), double-buffered
              + hid_pad * out_pad * 2             # W2 resident (bf16)
              + 2 * tm * out_pad * 2)             # Z output tile (bf16), double-buffered
    flops_a = 2 * n_pad * n_pad * hid_pad + 2 * n_pad * hid_pad * out_pad + 4 * n_pad * hid_pad
    bytes_a = (n_pad * n_pad + 2 * n_pad * hid_pad * 2 + hid_pad * out_pad * 2
               + n_pad * out_pad * 2 + n_pad * 8 + (hid_pad + out_pad) * 4)

    z_p = pl.pallas_call(
        gcn_layer0_kernel,
        out_shape=jax.ShapeDtypeStruct((n_pad, out_pad), jnp.bfloat16),
        grid_spec=pltpu.PrefetchScalarGridSpec(
            num_scalar_prefetch=0,
            grid=(nt,),
            in_specs=[
                pl.BlockSpec((tm, n_pad), lambda r: (r, 0)),          # A row tile (int8)
                pl.BlockSpec((tm, 1), lambda r: (r, 0)),              # d_in^{-1/2} rows
                pl.BlockSpec((tm, 1), lambda r: (r, 0)),              # d_out^{-1/2} rows
                pl.BlockSpec((n_pad, hid_pad), lambda r: (0, 0)),     # XWs (resident)
                pl.BlockSpec((1, hid_pad), lambda r: (0, 0)),         # b1
                pl.BlockSpec((tm, hid_pad), lambda r: (r, 0)),        # dropout tile (bf16)
                pl.BlockSpec((hid_pad, out_pad), lambda r: (0, 0)),   # W2 (resident, bf16)
            ],
            out_specs=pl.BlockSpec((tm, out_pad), lambda r: (r, 0)),
        ),
        compiler_params=pltpu.CompilerParams(
            dimension_semantics=("parallel",),
            vmem_limit_bytes=int(min(48 << 20, max(2 * vmem_a, 4 << 20))),
        ),
        cost_estimate=pl.CostEstimate(flops=flops_a, transcendentals=0,
                                      bytes_accessed=bytes_a),
    )(a_p, din_p, dout_p, xw_p, b1_p, drop_p, w2_p)

    # ---------------- layer 1: Y = D_in^{-1/2} (A @ Z) + b2 ----------------
    vmem_b = (2 * tm * n_pad + 2 * tm * 4 + n_pad * out_pad * 2 + out_pad * 4
              + 2 * tm * out_pad * 4)
    flops_b = 2 * n_pad * n_pad * out_pad + 2 * n_pad * out_pad
    bytes_b = (n_pad * n_pad + n_pad * out_pad * 2 + n_pad * out_pad * 4
               + n_pad * 4 + out_pad * 4)

    y_p = pl.pallas_call(
        gcn_layer1_kernel,
        out_shape=jax.ShapeDtypeStruct((n_pad, out_pad), jnp.float32),
        grid_spec=pltpu.PrefetchScalarGridSpec(
            num_scalar_prefetch=0,
            grid=(nt,),
            in_specs=[
                pl.BlockSpec((tm, n_pad), lambda r: (r, 0)),          # A row tile (int8)
                pl.BlockSpec((tm, 1), lambda r: (r, 0)),              # d_in^{-1/2} rows
                pl.BlockSpec((n_pad, out_pad), lambda r: (0, 0)),     # Z (resident, bf16)
                pl.BlockSpec((1, out_pad), lambda r: (0, 0)),         # b2
            ],
            out_specs=pl.BlockSpec((tm, out_pad), lambda r: (r, 0)),
        ),
        compiler_params=pltpu.CompilerParams(
            dimension_semantics=("parallel",),
            vmem_limit_bytes=int(min(48 << 20, max(2 * vmem_b, 4 << 20))),
        ),
        cost_estimate=pl.CostEstimate(flops=flops_b, transcendentals=0,
                                      bytes_accessed=bytes_b),
    )(a_p, din_p, z_p, b2_p)

    return y_p[:n, :f_out]


def build_adjacency(key, n):
    """Random undirected binary graph (no self-loops)."""
    upper = (jax.random.uniform(key, (n, n)) < 0.15).astype(jnp.float32)
    upper = jnp.triu(upper, k=1)
    return upper + upper.T


if __name__ == "__main__":
    # Small shapes consistent with GCN(in_size, hid_size, out_size); N/tm chosen so the
    # row-tiled grid has >1 tile per pallas_call (tm=256, n_pad=512 -> 2 row tiles).
    N, IN_SIZE, HID_SIZE, OUT_SIZE = 512, 16, 32, 8

    key = jax.random.PRNGKey(0)
    k_graph, k_feat, k_w1, k_b1, k_w2, k_b2, k_drop = jax.random.split(key, 7)

    adj = build_adjacency(k_graph, N)
    features = jax.random.normal(k_feat, (N, IN_SIZE), dtype=jnp.float32)

    # Parameter init (GraphConv uses xavier_uniform for weights; small random biases to
    # exercise the bias path).
    def xavier(k, fan_in, fan_out):
        lim = (6.0 / (fan_in + fan_out)) ** 0.5
        return jax.random.uniform(k, (fan_in, fan_out), jnp.float32, -lim, lim)

    w1 = xavier(k_w1, IN_SIZE, HID_SIZE)
    b1 = 0.1 * jax.random.normal(k_b1, (1, HID_SIZE), dtype=jnp.float32)
    w2 = xavier(k_w2, HID_SIZE, OUT_SIZE)
    b2 = 0.1 * jax.random.normal(k_b2, (1, OUT_SIZE), dtype=jnp.float32)

    # Training-mode dropout mask (p=0.5): keep w.p. 0.5, scale kept values by 2.
    keep = jax.random.bernoulli(k_drop, 0.5, (N, HID_SIZE))
    drop_mask = keep.astype(jnp.float32) * 2.0

    out = gcn_forward(adj, features, (w1, b1, w2, b2),
                      dropout_mask=drop_mask, training=True, tm=256)
    out = jax.block_until_ready(out)

    assert out.shape == (N, OUT_SIZE) and out.dtype == jnp.float32

    # Pure-JAX f32 reference (same dropout mask).
    deg = jnp.maximum(adj.sum(axis=1), 1.0)
    dinv = 1.0 / jnp.sqrt(deg)
    a_norm = adj * dinv[:, None] * dinv[None, :]
    h1_ref = jnp.maximum(a_norm @ (features @ w1) + b1, 0.0)
    y_ref = a_norm @ ((h1_ref * drop_mask) @ w2) + b2

    assert bool(jnp.all(jnp.isfinite(out)))
    assert bool(jnp.allclose(out, y_ref, rtol=2e-2, atol=1e-2)), \
        float(jnp.max(jnp.abs(out - y_ref)))

    print("KERNEL_OK")
</pallas_src>

<mosaic_0001>
module attributes {stable_mosaic.version = 11 : i64} {
  func.func @gcn_layer0_kernel(%arg0: i32, %arg1: memref<256x512xi8, #tpu.memory_space<vmem>>, %arg2: memref<256x1xf32, #tpu.memory_space<vmem>>, %arg3: memref<256x1xf32, #tpu.memory_space<vmem>>, %arg4: memref<512x128xbf16, #tpu.memory_space<vmem>>, %arg5: memref<1x128xf32, #tpu.memory_space<vmem>>, %arg6: memref<256x128xbf16, #tpu.memory_space<vmem>>, %arg7: memref<128x128xbf16, #tpu.memory_space<vmem>>, %arg8: memref<256x128xbf16, #tpu.memory_space<vmem>>) attributes {dimension_semantics = [#tpu.dimension_semantics<parallel>], iteration_bounds = array<i64: 2>, scalar_prefetch = 0 : i64, scratch_operands = 0 : i64, tpu.core_type = #tpu.core_type<tc>, window_params = [{transform_indices = @transform_0, window_bounds = array<i64: 256, 512>}, {transform_indices = @transform_1, window_bounds = array<i64: 256, 1>}, {transform_indices = @transform_2, window_bounds = array<i64: 256, 1>}, {pipeline_mode = #tpu.pipeline_mode<synchronous>, transform_indices = @transform_3, window_bounds = array<i64: 512, 128>}, {pipeline_mode = #tpu.pipeline_mode<synchronous>, transform_indices = @transform_4, window_bounds = array<i64: 1, 128>}, {transform_indices = @transform_5, window_bounds = array<i64: 256, 128>}, {pipeline_mode = #tpu.pipeline_mode<synchronous>, transform_indices = @transform_6, window_bounds = array<i64: 128, 128>}, {transform_indices = @transform_7, window_bounds = array<i64: 256, 128>}]} {
    %c0 = arith.constant 0 : index
    %c0_0 = arith.constant 0 : index
    %0 = vector.load %arg1[%c0, %c0_0] : memref<256x512xi8, #tpu.memory_space<vmem>>, vector<256x512xi8>
    %1 = arith.sitofp %0 : vector<256x512xi8> to vector<256x512xbf16>
    %c0_1 = arith.constant 0 : index
    %c0_2 = arith.constant 0 : index
    %2 = vector.load %arg4[%c0_1, %c0_2] : memref<512x128xbf16, #tpu.memory_space<vmem>>, vector<512x128xbf16>
    %cst = arith.constant dense<0.000000e+00> : vector<256x128xf32>
    %3 = tpu.matmul %1, %2, %cst {dimension_numbers = #tpu.dot_dimension_numbers<[1], [0], [0], [1], [0, 0, 1, 1], [], []>} : vector<256x512xbf16>, vector<512x128xbf16>, vector<256x128xf32> -> vector<256x128xf32>
    %c0_3 = arith.constant 0 : index
    %c0_4 = arith.constant 0 : index
    %4 = vector.load %arg2[%c0_3, %c0_4] : memref<256x1xf32, #tpu.memory_space<vmem>>, vector<256x1xf32>
    %5 = vector.broadcast %4 : vector<256x1xf32> to vector<256x128xf32>
    %6 = arith.mulf %5, %3 : vector<256x128xf32>
    %c0_5 = arith.constant 0 : index
    %c0_6 = arith.constant 0 : index
    %7 = vector.load %arg5[%c0_5, %c0_6] : memref<1x128xf32, #tpu.memory_space<vmem>>, vector<1x128xf32>
    %8 = vector.broadcast %7 : vector<1x128xf32> to vector<256x128xf32>
    %9 = arith.addf %6, %8 : vector<256x128xf32>
    %cst_7 = arith.constant 0.000000e+00 : f32
    %10 = vector.broadcast %cst_7 : f32 to vector<256x128xf32>
    %11 = arith.maximumf %9, %10 : vector<256x128xf32>
    %c0_8 = arith.constant 0 : index
    %c0_9 = arith.constant 0 : index
    %12 = vector.load %arg6[%c0_8, %c0_9] : memref<256x128xbf16, #tpu.memory_space<vmem>>, vector<256x128xbf16>
    %13 = arith.extf %12 : vector<256x128xbf16> to vector<256x128xf32>
    %14 = arith.mulf %11, %13 : vector<256x128xf32>
    %15 = arith.truncf %14 : vector<256x128xf32> to vector<256x128xbf16>
    %c0_10 = arith.constant 0 : index
    %c0_11 = arith.constant 0 : index
    %16 = vector.load %arg7[%c0_10, %c0_11] : memref<128x128xbf16, #tpu.memory_space<vmem>>, vector<128x128xbf16>
    %cst_12 = arith.constant dense<0.000000e+00> : vector<256x128xf32>
    %17 = tpu.matmul %15, %16, %cst_12 {dimension_numbers = #tpu.dot_dimension_numbers<[1], [0], [0], [1], [0, 0, 1, 1], [], []>} : vector<256x128xbf16>, vector<128x128xbf16>, vector<256x128xf32> -> vector<256x128xf32>
    %c0_13 = arith.constant 0 : index
    %c0_14 = arith.constant 0 : index
    %18 = vector.load %arg3[%c0_13, %c0_14] : memref<256x1xf32, #tpu.memory_space<vmem>>, vector<256x1xf32>
    %19 = vector.broadcast %18 : vector<256x1xf32> to vector<256x128xf32>
    %20 = arith.mulf %19, %17 : vector<256x128xf32>
    %21 = arith.truncf %20 : vector<256x128xf32> to vector<256x128xbf16>
    %c0_15 = arith.constant 0 : index
    %c0_16 = arith.constant 0 : index
    %22 = vector.load %arg8[%c0_15, %c0_16] : memref<256x128xbf16, #tpu.memory_space<vmem>>, vector<256x128xbf16>
    tpu.vector_store %arg8[%c0_15, %c0_16], %21 {strides = array<i32>} : memref<256x128xbf16, #tpu.memory_space<vmem>>, vector<256x128xbf16>,
    return
  }
  func.func @transform_0(%arg0: i32) -> (i32, i32) {
    %c0_i32 = arith.constant 0 : i32
    %c0_i32_0 = arith.constant 0 : i32
    return %arg0, %c0_i32 : i32, i32
  }
  func.func @transform_1(%arg0: i32) -> (i32, i32) {
    %c0_i32 = arith.constant 0 : i32
    %c0_i32_0 = arith.constant 0 : i32
    return %arg0, %c0_i32 : i32, i32
  }
  func.func @transform_2(%arg0: i32) -> (i32, i32) {
    %c0_i32 = arith.constant 0 : i32
    %c0_i32_0 = arith.constant 0 : i32
    return %arg0, %c0_i32 : i32, i32
  }
  func.func @transform_3(%arg0: i32) -> (i32, i32) {
    %c0_i32 = arith.constant 0 : i32
    %c0_i32_0 = arith.constant 0 : i32
    %c0_i32_1 = arith.constant 0 : i32
    return %c0_i32, %c0_i32_0 : i32, i32
  }
  func.func @transform_4(%arg0: i32) -> (i32, i32) {
    %c0_i32 = arith.constant 0 : i32
    %c0_i32_0 = arith.constant 0 : i32
    %c0_i32_1 = arith.constant 0 : i32
    return %c0_i32, %c0_i32_0 : i32, i32
  }
  func.func @transform_5(%arg0: i32) -> (i32, i32) {
    %c0_i32 = arith.constant 0 : i32
    %c0_i32_0 = arith.constant 0 : i32
    return %arg0, %c0_i32 : i32, i32
  }
  func.func @transform_6(%arg0: i32) -> (i32, i32) {
    %c0_i32 = arith.constant 0 : i32
    %c0_i32_0 = arith.constant 0 : i32
    %c0_i32_1 = arith.constant 0 : i32
    return %c0_i32, %c0_i32_0 : i32, i32
  }
  func.func @transform_7(%arg0: i32) -> (i32, i32) {
    %c0_i32 = arith.constant 0 : i32
    %c0_i32_0 = arith.constant 0 : i32
    return %arg0, %c0_i32 : i32, i32
  }
}

</mosaic_0001>

<llo_original>
// kernel: tpu_custom_call.1
$region0: #{tpu_custom_call.1}
  #allocation0 [shape = 'u32[]', space=smem, size = 0x4, offset = 0x4, fixed_abs, tag = 'smem constant byte address 0x4 - core index']
  #allocation1 [shape = 'u32[144,128]{1,0:T(1,128)}', space=vmem, size = 0x12000, scoped, tag = 'internal scratch']
  %s0 = inlined_call_operand.vmem [shape: s8[512,512], index: 0, kind: input, shape index: {}]
  %s1 = inlined_call_operand.vmem [shape: f32[512,1], index: 1, kind: input, shape index: {}]
  %s2 = inlined_call_operand.vmem [shape: f32[512,1], index: 2, kind: input, shape index: {}]
  %s3 = inlined_call_operand.vmem [shape: bf16[512,128], index: 3, kind: input, shape index: {}]
  %s4 = inlined_call_operand.vmem [shape: f32[1,128], index: 4, kind: input, shape index: {}]
  %s5 = inlined_call_operand.vmem [shape: bf16[512,128], index: 5, kind: input, shape index: {}]
  %s6 = inlined_call_operand.hbm [shape: bf16[128,128], index: 6, kind: input, shape index: {}]
  %s7 = inlined_call_operand.hbm [shape: bf16[512,128], index: 7, kind: output, shape index: {}]
  %s8 = sld [smem:[#allocation0]]
  $region65: #{tpu_custom_call.1} parent=0
    _
  %s10 = ssub.s32 1, %s8
  %s11 = scalar_select 0, %s10, %s8
  $region1: #{tpu_custom_call.1} parent=0
    #allocation2 [shape = 'u8[32768]{0}', space=vmem, size = 0x8000, scoped, tag = 'input window, operand 6, single buffered']
    #allocation3 [shape = 's32[2]{0}', space=sflag, size = 0x8, scoped, tag = 'scoped memory for tpu_custom_call.1']
    #allocation4 [shape = 's32[2]{0}', space=sflag, size = 0x8, scoped, tag = 'scoped memory for tpu_custom_call.1']
    #allocation5 [shape = 'u8[131072]{0}', space=vmem, size = 0x20000, scoped, tag = 'output window, operand 0']
    %12 = vsyncpa [#allocation3], 0
    %13 = vsyncpa [#allocation4], 0
    %s14 = scalar_lea.sflag [#allocation4], 1
    %15 = vsyncpa %s14, 0
    loop: start=0, step=1, limit=4
    $region2: #{tpu_custom_call.1} parent=1 // loop_pre_header
      _
    $region3: #{tpu_custom_call.1} parent=1 // loop_header
      %s17 = sphi 0, %s21
      %p18 = scmp.ge.s32.totalorder %s17, 4
      %s27 = sphi 0, %s29
      %s30 = sphi 0, %s27
      %s31 = sphi 0, %s30
      %s47 = sphi 0, %s31
      %s53 = sphi 0, %s55
      %s56 = sphi 0, %s53
      %s57 = sphi 0, %s56
      %s73 = sphi 0, %s57
      %s79 = sphi 0, %s81
      %s82 = sphi 0, %s79
      %s83 = sphi 0, %s82
      %s99 = sphi 0, %s83
      %s103 = sphi 0, %s103
      %s105 = sphi 0, %s103
      %s106 = sphi 0, %s105
      %s120 = sphi 0, %s106
      %s124 = sphi 0, %s124
      %s126 = sphi 0, %s124
      %s127 = sphi 0, %s126
      %s141 = sphi 0, %s127
      %s147 = sphi 0, %s149
      %s150 = sphi 0, %s147
      %s151 = sphi 0, %s150
      %s167 = sphi 0, %s151
      %s171 = sphi 0, %s171
      %s173 = sphi 0, %s171
      %s174 = sphi 0, %s173
      %s188 = sphi 0, %s174
      %s194 = sphi 0, %s196
      %s197 = sphi 0, %s194
      %s198 = sphi 0, %s197
      %s214 = sphi 0, %s198
    $region4: #{tpu_custom_call.1} parent=1 // loop_header_branch
      %20 = sbr.rel (%p18) target = $region8
    $region5: #{tpu_custom_call.1} parent=1 // loop_body
      %s22 = ssub.s32 %s17, 1
      %s23 = ssub.s32 %s17, 2
      %s24 = sadd.s32 %s17, 1
      %s25 = ssub.s32 %s17, %s24
      %p26 = scmp.eq.s32.totalorder %s25, 0
      %s28 = sadd.s32 %s27, 1
      %s29 = scalar_select %p26, %s27, %s28
      %p32 = pneg %p26
      %p33 = scmp.eq.s32.totalorder %s17, 1
      %p34 = por %p32, %p33
      %p35 = scmp.ne.s32.totalorder %s27, %s30
      %p36 = scmp.eq.s32.totalorder %s17, 0
      %p37 = por %p35, %p36
      %p38 = scmp.ne.s32.totalorder %s27, %s30
      %p39 = scmp.eq.s32.totalorder %s22, 1
      %p40 = por %p38, %p39
      %p41 = scmp.ne.s32.totalorder %s30, %s31
      %p42 = scmp.eq.s32.totalorder %s22, 0
      %p43 = por %p41, %p42
      %p44 = scmp.ne.s32.totalorder %s30, %s31
      %p45 = scmp.eq.s32.totalorder %s23, 1
      %p46 = por %p44, %p45
      %p48 = scmp.ne.s32.totalorder %s31, %s47
      %p49 = scmp.eq.s32.totalorder %s23, 0
      %p50 = por %p48, %p49
      %s51 = ssub.s32 %s17, %s24
      %p52 = scmp.eq.s32.totalorder %s51, 0
      %s54 = sadd.s32 %s53, 1
      %s55 = scalar_select %p52, %s53, %s54
      %p58 = pneg %p52
      %p59 = scmp.eq.s32.totalorder %s17, 1
      %p60 = por %p58, %p59
      %p61 = scmp.ne.s32.totalorder %s53, %s56
      %p62 = scmp.eq.s32.totalorder %s17, 0
      %p63 = por %p61, %p62
      %p64 = scmp.ne.s32.totalorder %s53, %s56
      %p65 = scmp.eq.s32.totalorder %s22, 1
      %p66 = por %p64, %p65
      %p67 = scmp.ne.s32.totalorder %s56, %s57
      %p68 = scmp.eq.s32.totalorder %s22, 0
      %p69 = por %p67, %p68
      %p70 = scmp.ne.s32.totalorder %s56, %s57
      %p71 = scmp.eq.s32.totalorder %s23, 1
      %p72 = por %p70, %p71
      %p74 = scmp.ne.s32.totalorder %s57, %s73
      %p75 = scmp.eq.s32.totalorder %s23, 0
      %p76 = por %p74, %p75
      %s77 = ssub.s32 %s17, %s24
      %p78 = scmp.eq.s32.totalorder %s77, 0
      %s80 = sadd.s32 %s79, 1
      %s81 = scalar_select %p78, %s79, %s80
      %p84 = pneg %p78
      %p85 = scmp.eq.s32.totalorder %s17, 1
      %p86 = por %p84, %p85
      %p87 = scmp.ne.s32.totalorder %s79, %s82
      %p88 = scmp.eq.s32.totalorder %s17, 0
      %p89 = por %p87, %p88
      %p90 = scmp.ne.s32.totalorder %s79, %s82
      %p91 = scmp.eq.s32.totalorder %s22, 1
      %p92 = por %p90, %p91
      %p93 = scmp.ne.s32.totalorder %s82, %s83
      %p94 = scmp.eq.s32.totalorder %s22, 0
      %p95 = por %p93, %p94
      %p96 = scmp.ne.s32.totalorder %s82, %s83
      %p97 = scmp.eq.s32.totalorder %s23, 1
      %p98 = por %p96, %p97
      %p100 = scmp.ne.s32.totalorder %s83, %s99
      %p101 = scmp.eq.s32.totalorder %s23, 0
      %p102 = por %p100, %p101
      %s104 = sadd.s32 %s103, 1
      %p107 = scmp.eq.s32.totalorder %s17, 1
      %p108 = scmp.ne.s32.totalorder %s103, %s105
      %p109 = scmp.eq.s32.totalorder %s17, 0
      %p110 = por %p108, %p109
      %p111 = scmp.ne.s32.totalorder %s103, %s105
      %p112 = scmp.eq.s32.totalorder %s22, 1
      %p113 = por %p111, %p112
      %p114 = scmp.ne.s32.totalorder %s105, %s106
      %p115 = scmp.eq.s32.totalorder %s22, 0
      %p116 = por %p114, %p115
      %p117 = scmp.ne.s32.totalorder %s105, %s106
      %p118 = scmp.eq.s32.totalorder %s23, 1
      %p119 = por %p117, %p118
      %p121 = scmp.ne.s32.totalorder %s106, %s120
      %p122 = scmp.eq.s32.totalorder %s23, 0
      %p123 = por %p121, %p122
      %s125 = sadd.s32 %s124, 1
      %p128 = scmp.eq.s32.totalorder %s17, 1
      %p129 = scmp.ne.s32.totalorder %s124, %s126
      %p130 = scmp.eq.s32.totalorder %s17, 0
      %p131 = por %p129, %p130
      %p132 = scmp.ne.s32.totalorder %s124, %s126
      %p133 = scmp.eq.s32.totalorder %s22, 1
      %p134 = por %p132, %p133
      %p135 = scmp.ne.s32.totalorder %s126, %s127
      %p136 = scmp.eq.s32.totalorder %s22, 0
      %p137 = por %p135, %p136
      %p138 = scmp.ne.s32.totalorder %s126, %s127
      %p139 = scmp.eq.s32.totalorder %s23, 1
      %p140 = por %p138, %p139
      %p142 = scmp.ne.s32.totalorder %s127, %s141
      %p143 = scmp.eq.s32.totalorder %s23, 0
      %p144 = por %p142, %p143
      %s145 = ssub.s32 %s17, %s24
      %p146 = scmp.eq.s32.totalorder %s145, 0
      %s148 = sadd.s32 %s147, 1
      %s149 = scalar_select %p146, %s147, %s148
      %p152 = pneg %p146
      %p153 = scmp.eq.s32.totalorder %s17, 1
      %p154 = por %p152, %p153
      %p155 = scmp.ne.s32.totalorder %s147, %s150
      %p156 = scmp.eq.s32.totalorder %s17, 0
      %p157 = por %p155, %p156
      %p158 = scmp.ne.s32.totalorder %s147, %s150
      %p159 = scmp.eq.s32.totalorder %s22, 1
      %p160 = por %p158, %p159
      %p161 = scmp.ne.s32.totalorder %s150, %s151
      %p162 = scmp.eq.s32.totalorder %s22, 0
      %p163 = por %p161, %p162
      %p164 = scmp.ne.s32.totalorder %s150, %s151
      %p165 = scmp.eq.s32.totalorder %s23, 1
      %p166 = por %p164, %p165
      %p168 = scmp.ne.s32.totalorder %s151, %s167
      %p169 = scmp.eq.s32.totalorder %s23, 0
      %p170 = por %p168, %p169
      %s172 = sadd.s32 %s171, 1
      %p175 = scmp.eq.s32.totalorder %s17, 1
      %p176 = scmp.ne.s32.totalorder %s171, %s173
      %p177 = scmp.eq.s32.totalorder %s17, 0
      %p178 = por %p176, %p177
      %p179 = scmp.ne.s32.totalorder %s171, %s173
      %p180 = scmp.eq.s32.totalorder %s22, 1
      %p181 = por %p179, %p180
      %p182 = scmp.ne.s32.totalorder %s173, %s174
      %p183 = scmp.eq.s32.totalorder %s22, 0
      %p184 = por %p182, %p183
      %p185 = scmp.ne.s32.totalorder %s173, %s174
      %p186 = scmp.eq.s32.totalorder %s23, 1
      %p187 = por %p185, %p186
      %p189 = scmp.ne.s32.totalorder %s174, %s188
      %p190 = scmp.eq.s32.totalorder %s23, 0
      %p191 = por %p189, %p190
      %s192 = ssub.s32 %s17, %s24
      %p193 = scmp.eq.s32.totalorder %s192, 0
      %s195 = sadd.s32 %s194, 1
      %s196 = scalar_select %p193, %s194, %s195
      %p199 = pneg %p193
      %p200 = scmp.eq.s32.totalorder %s17, 1
      %p201 = por %p199, %p200
      %p202 = scmp.ne.s32.totalorder %s194, %s197
      %p203 = scmp.eq.s32.totalorder %s17, 0
      %p204 = por %p202, %p203
      %p205 = scmp.ne.s32.totalorder %s194, %s197
      %p206 = scmp.eq.s32.totalorder %s22, 1
      %p207 = por %p205, %p206
      %p208 = scmp.ne.s32.totalorder %s197, %s198
      %p209 = scmp.eq.s32.totalorder %s22, 0
      %p210 = por %p208, %p209
      %p211 = scmp.ne.s32.totalorder %s197, %s198
      %p212 = scmp.eq.s32.totalorder %s23, 1
      %p213 = por %p211, %p212
      %p215 = scmp.ne.s32.totalorder %s198, %s214
      %p216 = scmp.eq.s32.totalorder %s23, 0
      %p217 = por %p215, %p216
      %p218 = scmp.le.s32.totalorder 1, %s17
      %p219 = scmp.lt.s32.totalorder %s17, 3
      %p220 = pnand %p218, %p219
      %p221 = pneg %p220
      // Predicated region
      $region9: #{tpu_custom_call.1} parent=5 // pred_check
        _
      $region10: #{tpu_custom_call.1} parent=5 // pred_check_branch
        %223 = sbr.rel (%p220) target = $region12
      $region11: #{tpu_custom_call.1} parent=5 // pred_region
        %s224 = ssub.s32 %s17, 1
        // Predicated region
        $region13: #{tpu_custom_call.1} parent=11 // pred_check
          %p225 = pneg %p116
        $region14: #{tpu_custom_call.1} parent=11 // pred_check_branch
          %227 = sbr.rel (%p225) target = $region16
        $region15: #{tpu_custom_call.1} parent=11 // pred_region
          _
        $region16: #{tpu_custom_call.1} parent=11 // pred_fallthru
          _
        // Predicated region
        $region17: #{tpu_custom_call.1} parent=11 // pred_check
          %p228 = pneg %p137
        $region18: #{tpu_custom_call.1} parent=11 // pred_check_branch
          %230 = sbr.rel (%p228) target = $region20
        $region19: #{tpu_custom_call.1} parent=11 // pred_region
          _
        $region20: #{tpu_custom_call.1} parent=11 // pred_fallthru
          _
        // Predicated region
        $region21: #{tpu_custom_call.1} parent=11 // pred_check
          %p231 = pneg %p184
        $region22: #{tpu_custom_call.1} parent=11 // pred_check_branch
          %233 = sbr.rel (%p231) target = $region24
        $region23: #{tpu_custom_call.1} parent=11 // pred_region
          %s235 = ssub.s32 1024, 1024
          %236 = vsyncadd [#allocation3], %s235
          %s237 = sshll.u32 [#allocation2], 4
          %s238 = int_to_ptr.vmem [resolvable:$true] %s237
          %243 = dma.hbm_to_vmem [thread:$0]  %s6, 1024, %s238, [#allocation3], 64, 64, 4
        $region24: #{tpu_custom_call.1} parent=11 // pred_fallthru
          _
      $region12: #{tpu_custom_call.1} parent=5 // pred_fallthru
        _
      %p244 = scmp.lt.s32.totalorder %s17, 2
      // Predicated region
      $region25: #{tpu_custom_call.1} parent=5 // pred_check
        %p245 = pneg %p244
      $region26: #{tpu_custom_call.1} parent=5 // pred_check_branch
        %247 = sbr.rel (%p245) target = $region28
      $region27: #{tpu_custom_call.1} parent=5 // pred_region
        // Predicated region
        $region29: #{tpu_custom_call.1} parent=27 // pred_check
          %p248 = pneg %p37
        $region30: #{tpu_custom_call.1} parent=27 // pred_check_branch
          %250 = sbr.rel (%p248) target = $region32
        $region31: #{tpu_custom_call.1} parent=27 // pred_region
          %s251 = smul.u32 8, %s17
          %p252 = scmp.lt.s32.totalorder %s251, 15
          %s253 = scalar_select %p252, %s251, 15
          %s254 = smul.addr %s253, 4
          %s255 = smul.addr %s254, 8
          %s256 = scalar_lea.vmem %s0, %s255
          %s257 = smul.u32 8, %s17
        $region32: #{tpu_custom_call.1} parent=27 // pred_fallthru
          _
        // Predicated region
        $region33: #{tpu_custom_call.1} parent=27 // pred_check
          %p258 = pneg %p63
        $region34: #{tpu_custom_call.1} parent=27 // pred_check_branch
          %260 = sbr.rel (%p258) target = $region36
        $region35: #{tpu_custom_call.1} parent=27 // pred_region
          %s261 = smul.u32 32, %s17
          %p262 = scmp.lt.s32.totalorder %s261, 63
          %s263 = scalar_select %p262, %s261, 63
          %s264 = smul.addr %s263, 8
          %s265 = scalar_lea.vmem %s1, %s264
          %s266 = smul.u32 32, %s17
        $region36: #{tpu_custom_call.1} parent=27 // pred_fallthru
          _
        // Predicated region
        $region37: #{tpu_custom_call.1} parent=27 // pred_check
          %p267 = pneg %p89
        $region38: #{tpu_custom_call.1} parent=27 // pred_check_branch
          %269 = sbr.rel (%p267) target = $region40
        $region39: #{tpu_custom_call.1} parent=27 // pred_region
          %s270 = smul.u32 32, %s17
          %p271 = scmp.lt.s32.totalorder %s270, 63
          %s272 = scalar_select %p271, %s270, 63
          %s273 = smul.addr %s272, 8
          %s274 = scalar_lea.vmem %s2, %s273
          %s275 = smul.u32 32, %s17
        $region40: #{tpu_custom_call.1} parent=27 // pred_fallthru
          _
        // Predicated region
        $region41: #{tpu_custom_call.1} parent=27 // pred_check
          %p276 = pneg %p157
        $region42: #{tpu_custom_call.1} parent=27 // pred_check_branch
          %278 = sbr.rel (%p276) target = $region44
        $region43: #{tpu_custom_call.1} parent=27 // pred_region
          %s279 = smul.u32 32, %s17
          %p280 = scmp.lt.s32.totalorder %s279, 63
          %s281 = scalar_select %p280, %s279, 63
          %s282 = smul.addr %s281, 4
          %s283 = scalar_lea.vmem %s5, %s282
          %s284 = smul.u32 32, %s17
        $region44: #{tpu_custom_call.1} parent=27 // pred_fallthru
          _
      $region28: #{tpu_custom_call.1} parent=5 // pred_fallthru
        _
      %p285 = scmp.le.s32.totalorder 1, %s17
      %p286 = scmp.lt.s32.totalorder %s17, 3
      %p287 = pnand %p285, %p286
      %p288 = pneg %p287
      // Predicated region
      $region45: #{tpu_custom_call.1} parent=5 // pred_check
        _
      $region46: #{tpu_custom_call.1} parent=5 // pred_check_branch
        %290 = sbr.rel (%p287) target = $region48
      $region47: #{tpu_custom_call.1} parent=5 // pred_region
        %s291 = ssub.s32 %s17, 1
        // Predicated region
        $region49: #{tpu_custom_call.1} parent=47 // pred_check
          %p292 = pneg %p184
        $region50: #{tpu_custom_call.1} parent=47 // pred_check_branch
          %294 = sbr.rel (%p292) target = $region52
        $region51: #{tpu_custom_call.1} parent=47 // pred_region
          %295 = dma.done [#allocation3], 1024
        $region52: #{tpu_custom_call.1} parent=47 // pred_fallthru
          _
        %s296 = smul.u32 8, %s22
        %p297 = scmp.lt.s32.totalorder %s296, 15
        %s298 = scalar_select %p297, %s296, 15
        %s299 = smul.addr %s298, 4
        %s300 = smul.addr %s299, 8
        %s301 = scalar_lea.vmem %s0, %s300
        %p302 = pneg %p43
        %p303 = pneg %p40
        %s304 = smul.u32 32, %s22
        %p305 = scmp.lt.s32.totalorder %s304, 63
        %s306 = scalar_select %p305, %s304, 63
        %s307 = smul.addr %s306, 8
        %s308 = scalar_lea.vmem %s1, %s307
        %p309 = pneg %p69
        %p310 = pneg %p66
        %s311 = smul.u32 32, %s22
        %p312 = scmp.lt.s32.totalorder %s311, 63
        %s313 = scalar_select %p312, %s311, 63
        %s314 = smul.addr %s313, 8
        %s315 = scalar_lea.vmem %s2, %s314
        %p316 = pneg %p95
        %p317 = pneg %p92
        %p318 = pneg %p116
        %p319 = pneg %p113
        %p320 = pneg %p137
        %p321 = pneg %p134
        %s322 = smul.u32 32, %s22
        %p323 = scmp.lt.s32.totalorder %s322, 63
        %s324 = scalar_select %p323, %s322, 63
        %s325 = smul.addr %s324, 4
        %s326 = scalar_lea.vmem %s5, %s325
        %p327 = pneg %p163
        %p328 = pneg %p160
        %p329 = pneg %p184
        %p330 = pneg %p181
        %p331 = pneg %p210
        %p332 = pneg %p207
        %s333 = sand.u32 %s197, 1
        %s334 = scalar_lea.sflag [#allocation4], %s333
        %s335 = sand.u32 %s197, 1
        %s336 = smul.addr %s335, 128
        %s337 = scalar_lea.vmem [#allocation5], %s336
        %s338 = smul.u32 8, %s22
        %p339 = scmp.lt.s32.totalorder %s338, 15
        %s340 = scalar_select %p339, %s338, 15
        %s341 = smul.addr %s340, 4
        %s342 = smul.addr %s341, 8
        %s343 = scalar_lea.vmem %s0, %s342
        %s344 = smul.u32 8, %s22
        %s345 = smul.u32 32, %s22
        %p346 = scmp.lt.s32.totalorder %s345, 63
        %s347 = scalar_select %p346, %s345, 63
        %s348 = smul.addr %s347, 8
        %s349 = scalar_lea.vmem %s1, %s348
        %s350 = smul.u32 32, %s22
        %s351 = smul.u32 32, %s22
        %p352 = scmp.lt.s32.totalorder %s351, 63
        %s353 = scalar_select %p352, %s351, 63
        %s354 = smul.addr %s353, 8
        %s355 = scalar_lea.vmem %s2, %s354
        %s356 = smul.u32 32, %s22
        %s357 = smul.u32 32, %s22
        %p358 = scmp.lt.s32.totalorder %s357, 63
        %s359 = scalar_select %p358, %s357, 63
        %s360 = smul.addr %s359, 4
        %s361 = scalar_lea.vmem %s5, %s360
        %s362 = smul.u32 32, %s22
        %s363 = smul.u32 32, %s22
        %v365 = vld [vmem:[%s343] sm:$0xff]
        %v366 = vld [vmem:[%s343 + $0x8] sm:$0xff]
        %v367 = vld [vmem:[%s343 + $0x10] sm:$0xff]
        %v368 = vld [vmem:[%s343 + $0x18] sm:$0xff]
        %v369 = vld [vmem:[%s343 + $0x20] sm:$0xff]
        %v370 = vld [vmem:[%s343 + $0x28] sm:$0xff]
        %v371 = vld [vmem:[%s343 + $0x30] sm:$0xff]
        %v372 = vld [vmem:[%s343 + $0x38] sm:$0xff]
        %v373 = vld [vmem:[%s343 + $0x40] sm:$0xff]
        %v374 = vld [vmem:[%s343 + $0x48] sm:$0xff]
        %v375 = vld [vmem:[%s343 + $0x50] sm:$0xff]
        %v376 = vld [vmem:[%s343 + $0x58] sm:$0xff]
        %v377 = vld [vmem:[%s343 + $0x60] sm:$0xff]
        %v378 = vld [vmem:[%s343 + $0x68] sm:$0xff]
        %v379 = vld [vmem:[%s343 + $0x70] sm:$0xff]
        %v380 = vld [vmem:[%s343 + $0x78] sm:$0xff]
        %v381 = vld [vmem:[%s343 + $0x80] sm:$0xff]
        %v382 = vld [vmem:[%s343 + $0x88] sm:$0xff]
        %v383 = vld [vmem:[%s343 + $0x90] sm:$0xff]
        %v384 = vld [vmem:[%s343 + $0x98] sm:$0xff]
        %v385 = vld [vmem:[%s343 + $0xa0] sm:$0xff]
        %v386 = vld [vmem:[%s343 + $0xa8] sm:$0xff]
        %v387 = vld [vmem:[%s343 + $0xb0] sm:$0xff]
        %v388 = vld [vmem:[%s343 + $0xb8] sm:$0xff]
        %v389 = vld [vmem:[%s343 + $0xc0] sm:$0xff]
        %v390 = vld [vmem:[%s343 + $0xc8] sm:$0xff]
        %v391 = vld [vmem:[%s343 + $0xd0] sm:$0xff]
        %v392 = vld [vmem:[%s343 + $0xd8] sm:$0xff]
        %v393 = vld [vmem:[%s343 + $0xe0] sm:$0xff]
        %v394 = vld [vmem:[%s343 + $0xe8] sm:$0xff]
        %v395 = vld [vmem:[%s343 + $0xf0] sm:$0xff]
        %v396 = vld [vmem:[%s343 + $0xf8] sm:$0xff]
        %v397 = vunpack.c.l.s8.bf16 %v365
        %v398 = vunpack.c.l.s8.bf16 %v366
        %v399 = vunpack.c.l.s8.bf16 %v367
        %v400 = vunpack.c.l.s8.bf16 %v368
        %v401 = vunpack.c.h.s8.bf16 %v365
        %v402 = vunpack.c.h.s8.bf16 %v366
        %v403 = vunpack.c.h.s8.bf16 %v367
        %v404 = vunpack.c.h.s8.bf16 %v368
        %v405 = vunpack.c.l.s8.bf16 %v369
        %v406 = vunpack.c.l.s8.bf16 %v370
        %v407 = vunpack.c.l.s8.bf16 %v371
        %v408 = vunpack.c.l.s8.bf16 %v372
        %v409 = vunpack.c.h.s8.bf16 %v369
        %v410 = vunpack.c.h.s8.bf16 %v370
        %v411 = vunpack.c.h.s8.bf16 %v371
        %v412 = vunpack.c.h.s8.bf16 %v372
        %v413 = vunpack.c.l.s8.bf16 %v373
        %v414 = vunpack.c.l.s8.bf16 %v374
        %v415 = vunpack.c.l.s8.bf16 %v375
        %v416 = vunpack.c.l.s8.bf16 %v376
        %v417 = vunpack.c.h.s8.bf16 %v373
        %v418 = vunpack.c.h.s8.bf16 %v374
        %v419 = vunpack.c.h.s8.bf16 %v375
        %v420 = vunpack.c.h.s8.bf16 %v376
        %v421 = vunpack.c.l.s8.bf16 %v377
        %v422 = vunpack.c.l.s8.bf16 %v378
        %v423 = vunpack.c.l.s8.bf16 %v379
        %v424 = vunpack.c.l.s8.bf16 %v380
        %v425 = vunpack.c.h.s8.bf16 %v377
        %v426 = vunpack.c.h.s8.bf16 %v378
        %v427 = vunpack.c.h.s8.bf16 %v379
        %v428 = vunpack.c.h.s8.bf16 %v380
        %v429 = vunpack.c.l.s8.bf16 %v381
        %v430 = vunpack.c.l.s8.bf16 %v382
        %v431 = vunpack.c.l.s8.bf16 %v383
        %v432 = vunpack.c.l.s8.bf16 %v384
        %v433 = vunpack.c.h.s8.bf16 %v381
        %v434 = vunpack.c.h.s8.bf16 %v382
        %v435 = vunpack.c.h.s8.bf16 %v383
        %v436 = vunpack.c.h.s8.bf16 %v384
        %v437 = vunpack.c.l.s8.bf16 %v385
        %v438 = vunpack.c.l.s8.bf16 %v386
        %v439 = vunpack.c.l.s8.bf16 %v387
        %v440 = vunpack.c.l.s8.bf16 %v388
        %v441 = vunpack.c.h.s8.bf16 %v385
        %v442 = vunpack.c.h.s8.bf16 %v386
        %v443 = vunpack.c.h.s8.bf16 %v387
        %v444 = vunpack.c.h.s8.bf16 %v388
        %v445 = vunpack.c.l.s8.bf16 %v389
        %v446 = vunpack.c.l.s8.bf16 %v390
        %v447 = vunpack.c.l.s8.bf16 %v391
        %v448 = vunpack.c.l.s8.bf16 %v392
        %v449 = vunpack.c.h.s8.bf16 %v389
        %v450 = vunpack.c.h.s8.bf16 %v390
        %v451 = vunpack.c.h.s8.bf16 %v391
        %v452 = vunpack.c.h.s8.bf16 %v392
        %v453 = vunpack.c.l.s8.bf16 %v393
        %v454 = vunpack.c.l.s8.bf16 %v394
        %v455 = vunpack.c.l.s8.bf16 %v395
        %v456 = vunpack.c.l.s8.bf16 %v396
        %v457 = vunpack.c.h.s8.bf16 %v393
        %v458 = vunpack.c.h.s8.bf16 %v394
        %v459 = vunpack.c.h.s8.bf16 %v395
        %v460 = vunpack.c.h.s8.bf16 %v396
        %v461 = vld [vmem:[%s3] sm:$0xf]
        %v462 = vld [vmem:[%s3 + $0x4] sm:$0xf]
        %v463 = vld [vmem:[%s3 + $0x8] sm:$0xf]
        %v464 = vld [vmem:[%s3 + $0xc] sm:$0xf]
        %v465 = vld [vmem:[%s3 + $0x10] sm:$0xf]
        %v466 = vld [vmem:[%s3 + $0x14] sm:$0xf]
        %v467 = vld [vmem:[%s3 + $0x18] sm:$0xf]
        %v468 = vld [vmem:[%s3 + $0x1c] sm:$0xf]
        %v469 = vld [vmem:[%s3 + $0x20] sm:$0xf]
        %v470 = vld [vmem:[%s3 + $0x24] sm:$0xf]
        %v471 = vld [vmem:[%s3 + $0x28] sm:$0xf]
        %v472 = vld [vmem:[%s3 + $0x2c] sm:$0xf]
        %v473 = vld [vmem:[%s3 + $0x30] sm:$0xf]
        %v474 = vld [vmem:[%s3 + $0x34] sm:$0xf]
        %v475 = vld [vmem:[%s3 + $0x38] sm:$0xf]
        %v476 = vld [vmem:[%s3 + $0x3c] sm:$0xf]
        %v477 = vld [vmem:[%s3 + $0x40] sm:$0xf]
        %v478 = vld [vmem:[%s3 + $0x44] sm:$0xf]
        %v479 = vld [vmem:[%s3 + $0x48] sm:$0xf]
        %v480 = vld [vmem:[%s3 + $0x4c] sm:$0xf]
        %v481 = vld [vmem:[%s3 + $0x50] sm:$0xf]
        %v482 = vld [vmem:[%s3 + $0x54] sm:$0xf]
        %v483 = vld [vmem:[%s3 + $0x58] sm:$0xf]
        %v484 = vld [vmem:[%s3 + $0x5c] sm:$0xf]
        %v485 = vld [vmem:[%s3 + $0x60] sm:$0xf]
        %v486 = vld [vmem:[%s3 + $0x64] sm:$0xf]
        %v487 = vld [vmem:[%s3 + $0x68] sm:$0xf]
        %v488 = vld [vmem:[%s3 + $0x6c] sm:$0xf]
        %v489 = vld [vmem:[%s3 + $0x70] sm:$0xf]
        %v490 = vld [vmem:[%s3 + $0x74] sm:$0xf]
        %v491 = vld [vmem:[%s3 + $0x78] sm:$0xf]
        %v492 = vld [vmem:[%s3 + $0x7c] sm:$0xf]
        %v493 = vld [vmem:[%s3 + $0x80] sm:$0xf]
        %v494 = vld [vmem:[%s3 + $0x84] sm:$0xf]
        %v495 = vld [vmem:[%s3 + $0x88] sm:$0xf]
        %v496 = vld [vmem:[%s3 + $0x8c] sm:$0xf]
        %v497 = vld [vmem:[%s3 + $0x90] sm:$0xf]
        %v498 = vld [vmem:[%s3 + $0x94] sm:$0xf]
        %v499 = vld [vmem:[%s3 + $0x98] sm:$0xf]
        %v500 = vld [vmem:[%s3 + $0x9c] sm:$0xf]
        %v501 = vld [vmem:[%s3 + $0xa0] sm:$0xf]
        %v502 = vld [vmem:[%s3 + $0xa4] sm:$0xf]
        %v503 = vld [vmem:[%s3 + $0xa8] sm:$0xf]
        %v504 = vld [vmem:[%s3 + $0xac] sm:$0xf]
        %v505 = vld [vmem:[%s3 + $0xb0] sm:$0xf]
        %v506 = vld [vmem:[%s3 + $0xb4] sm:$0xf]
        %v507 = vld [vmem:[%s3 + $0xb8] sm:$0xf]
        %v508 = vld [vmem:[%s3 + $0xbc] sm:$0xf]
        %v509 = vld [vmem:[%s3 + $0xc0] sm:$0xf]
        %v510 = vld [vmem:[%s3 + $0xc4] sm:$0xf]
        %v511 = vld [vmem:[%s3 + $0xc8] sm:$0xf]
        %v512 = vld [vmem:[%s3 + $0xcc] sm:$0xf]
        %v513 = vld [vmem:[%s3 + $0xd0] sm:$0xf]
        %v514 = vld [vmem:[%s3 + $0xd4] sm:$0xf]
        %v515 = vld [vmem:[%s3 + $0xd8] sm:$0xf]
        %v516 = vld [vmem:[%s3 + $0xdc] sm:$0xf]
        %v517 = vld [vmem:[%s3 + $0xe0] sm:$0xf]
        %v518 = vld [vmem:[%s3 + $0xe4] sm:$0xf]
        %v519 = vld [vmem:[%s3 + $0xe8] sm:$0xf]
        %v520 = vld [vmem:[%s3 + $0xec] sm:$0xf]
        %v521 = vld [vmem:[%s3 + $0xf0] sm:$0xf]
        %v522 = vld [vmem:[%s3 + $0xf4] sm:$0xf]
        %v523 = vld [vmem:[%s3 + $0xf8] sm:$0xf]
        %v524 = vld [vmem:[%s3 + $0xfc] sm:$0xf]
        %v589 = vunpack.c.l.b16 %v461
        %v590 = vunpack.c.l.b16 %v462
        %v591 = vunpack.c.l.b16 %v463
        %v592 = vunpack.c.l.b16 %v464
        %v593 = vunpack.c.l.b16 %v465
        %v594 = vunpack.c.l.b16 %v466
        %v595 = vunpack.c.l.b16 %v467
        %v596 = vunpack.c.l.b16 %v468
        %v597 = vunpack.c.l.b16 %v469
        %v598 = vunpack.c.l.b16 %v470
        %v599 = vunpack.c.l.b16 %v471
        %v600 = vunpack.c.l.b16 %v472
        %v601 = vunpack.c.l.b16 %v473
        %v602 = vunpack.c.l.b16 %v474
        %v603 = vunpack.c.l.b16 %v475
        %v604 = vunpack.c.l.b16 %v476
        %v605 = vunpack.c.l.b16 %v477
        %v606 = vunpack.c.l.b16 %v478
        %v607 = vunpack.c.l.b16 %v479
        %v608 = vunpack.c.l.b16 %v480
        %v609 = vunpack.c.l.b16 %v481
        %v610 = vunpack.c.l.b16 %v482
        %v611 = vunpack.c.l.b16 %v483
        %v612 = vunpack.c.l.b16 %v484
        %v613 = vunpack.c.l.b16 %v485
        %v614 = vunpack.c.l.b16 %v486
        %v615 = vunpack.c.l.b16 %v487
        %v616 = vunpack.c.l.b16 %v488
        %v617 = vunpack.c.l.b16 %v489
        %v618 = vunpack.c.l.b16 %v490
        %v619 = vunpack.c.l.b16 %v491
        %v620 = vunpack.c.l.b16 %v492
        %v621 = vunpack.c.l.b16 %v493
        %v622 = vunpack.c.l.b16 %v494
        %v623 = vunpack.c.l.b16 %v495
        %v624 = vunpack.c.l.b16 %v496
        %v625 = vunpack.c.l.b16 %v497
        %v626 = vunpack.c.l.b16 %v498
        %v627 = vunpack.c.l.b16 %v499
        %v628 = vunpack.c.l.b16 %v500
        %v629 = vunpack.c.l.b16 %v501
        %v630 = vunpack.c.l.b16 %v502
        %v631 = vunpack.c.l.b16 %v503
        %v632 = vunpack.c.l.b16 %v504
        %v633 = vunpack.c.l.b16 %v505
        %v634 = vunpack.c.l.b16 %v506
        %v635 = vunpack.c.l.b16 %v507
        %v636 = vunpack.c.l.b16 %v508
        %v637 = vunpack.c.l.b16 %v509
        %v638 = vunpack.c.l.b16 %v510
        %v639 = vunpack.c.l.b16 %v511
        %v640 = vunpack.c.l.b16 %v512
        %v641 = vunpack.c.l.b16 %v513
        %v642 = vunpack.c.l.b16 %v514
        %v643 = vunpack.c.l.b16 %v515
        %v644 = vunpack.c.l.b16 %v516
        %v645 = vunpack.c.l.b16 %v517
        %v646 = vunpack.c.l.b16 %v518
        %v647 = vunpack.c.l.b16 %v519
        %v648 = vunpack.c.l.b16 %v520
        %v649 = vunpack.c.l.b16 %v521
        %v650 = vunpack.c.l.b16 %v522
        %v651 = vunpack.c.l.b16 %v523
        %v652 = vunpack.c.l.b16 %v524
        %v653 = vpack.c.b16 %v590, %v589
        %v654 = vpack.c.b16 %v592, %v591
        %v655 = vpack.c.b16 %v594, %v593
        %v656 = vpack.c.b16 %v596, %v595
        %v657 = vpack.c.b16 %v598, %v597
        %v658 = vpack.c.b16 %v600, %v599
        %v659 = vpack.c.b16 %v602, %v601
        %v660 = vpack.c.b16 %v604, %v603
        %v661 = vpack.c.b16 %v606, %v605
        %v662 = vpack.c.b16 %v608, %v607
        %v663 = vpack.c.b16 %v610, %v609
        %v664 = vpack.c.b16 %v612, %v611
        %v665 = vpack.c.b16 %v614, %v613
        %v666 = vpack.c.b16 %v616, %v615
        %v667 = vpack.c.b16 %v618, %v617
        %v668 = vpack.c.b16 %v620, %v619
        %v669 = vpack.c.b16 %v622, %v621
        %v670 = vpack.c.b16 %v624, %v623
        %v671 = vpack.c.b16 %v626, %v625
        %v672 = vpack.c.b16 %v628, %v627
        %v673 = vpack.c.b16 %v630, %v629
        %v674 = vpack.c.b16 %v632, %v631
        %v675 = vpack.c.b16 %v634, %v633
        %v676 = vpack.c.b16 %v636, %v635
        %v677 = vpack.c.b16 %v638, %v637
        %v678 = vpack.c.b16 %v640, %v639
        %v679 = vpack.c.b16 %v642, %v641
        %v680 = vpack.c.b16 %v644, %v643
        %v681 = vpack.c.b16 %v646, %v645
        %v682 = vpack.c.b16 %v648, %v647
        %v683 = vpack.c.b16 %v650, %v649
        %v684 = vpack.c.b16 %v652, %v651
        %717 = vmatprep.subr.bf16.mxu0 0
        %718 = vmatpush1.bf16.msra.mxu0 %v660
        %719 = vmatprep.subr.bf16.mxu0 0
        %720 = vmatpush1.bf16.msra.mxu0 %v659
        %721 = vmatprep.subr.bf16.mxu0 0
        %722 = vmatpush1.bf16.msra.mxu0 %v658
        %723 = vmatprep.subr.bf16.mxu0 0
        %724 = vmatpush1.bf16.msra.mxu0 %v657
        %725 = vmatprep.subr.bf16.mxu0 0
        %726 = vmatpush1.bf16.msra.mxu0 %v656
        %727 = vmatprep.subr.bf16.mxu0 0
        %728 = vmatpush1.bf16.msra.mxu0 %v655
        %729 = vmatprep.subr.bf16.mxu0 0
        %730 = vmatpush1.bf16.msra.mxu0 %v654
        %731 = vmatprep.subr.bf16.mxu0 0
        %732 = vmatpush1.bf16.msra.mxu0 %v653
        %733 = vmatprep.subr.bf16.mxu0 0
        %734 = vmatpush2.bf16.msra.mxu0 %v668
        %735 = vmatprep.subr.bf16.mxu0 0
        %736 = vmatpush2.bf16.msra.mxu0 %v667
        %737 = vmatprep.subr.bf16.mxu0 0
        %738 = vmatpush2.bf16.msra.mxu0 %v666
        %739 = vmatprep.subr.bf16.mxu0 0
        %740 = vmatpush2.bf16.msra.mxu0 %v665
        %741 = vmatprep.subr.bf16.mxu0 0
        %742 = vmatpush2.bf16.msra.mxu0 %v664
        %743 = vmatprep.subr.bf16.mxu0 0
        %744 = vmatpush2.bf16.msra.mxu0 %v663
        %745 = vmatprep.subr.bf16.mxu0 0
        %746 = vmatpush2.bf16.msra.mxu0 %v662
        %747 = vmatprep.subr.bf16.mxu0 0
        %748 = vmatpush2.bf16.msra.mxu0 %v661
        %749 = vmatprep.mubr.bf16.mxu0 %v398
        %750 = vmatmul.mubr.bf16.gmra.mxu0 %v397
        %v751 = vpop.f32.mrf.mxu0
        %v752 = vadd.f32 0.0, %v751
        %v753 = vpop.f32.mrf.mxu0
        %v754 = vpop.f32.mrf.mxu0
        %v755 = vadd.f32 0.0, %v754
        %v756 = vpop.f32.mrf.mxu0
        %757 = vmatprep.mubr.bf16.mxu0 %v402
        %758 = vmatmul.mubr.bf16.gmra.mxu0 %v401
        %v759 = vpop.f32.mrf.mxu0
        %v760 = vadd.f32 0.0, %v759
        %v761 = vpop.f32.mrf.mxu0
        %v762 = vpop.f32.mrf.mxu0
        %v763 = vadd.f32 0.0, %v762
        %v764 = vpop.f32.mrf.mxu0
        %765 = vmatprep.mubr.bf16.mxu0 %v406
        %766 = vmatmul.mubr.bf16.gmra.mxu0 %v405
        %v767 = vpop.f32.mrf.mxu0
        %v768 = vadd.f32 0.0, %v767
        %v769 = vpop.f32.mrf.mxu0
        %v770 = vpop.f32.mrf.mxu0
        %v771 = vadd.f32 0.0, %v770
        %v772 = vpop.f32.mrf.mxu0
        %773 = vmatprep.mubr.bf16.mxu0 %v410
        %774 = vmatmul.mubr.bf16.gmra.mxu0 %v409
        %v775 = vpop.f32.mrf.mxu0
        %v776 = vadd.f32 0.0, %v775
        %v777 = vpop.f32.mrf.mxu0
        %v778 = vpop.f32.mrf.mxu0
        %v779 = vadd.f32 0.0, %v778
        %v780 = vpop.f32.mrf.mxu0
        %781 = vmatprep.mubr.bf16.mxu0 %v414
        %782 = vmatmul.mubr.bf16.gmra.mxu0 %v413
        %v783 = vpop.f32.mrf.mxu0
        %v784 = vadd.f32 0.0, %v783
        %v785 = vpop.f32.mrf.mxu0
        %v786 = vpop.f32.mrf.mxu0
        %v787 = vadd.f32 0.0, %v786
        %v788 = vpop.f32.mrf.mxu0
        %789 = vmatprep.mubr.bf16.mxu0 %v418
        %790 = vmatmul.mubr.bf16.gmra.mxu0 %v417
        %v791 = vpop.f32.mrf.mxu0
        %v792 = vadd.f32 0.0, %v791
        %v793 = vpop.f32.mrf.mxu0
        %v794 = vpop.f32.mrf.mxu0
        %v795 = vadd.f32 0.0, %v794
        %v796 = vpop.f32.mrf.mxu0
        %797 = vmatprep.mubr.bf16.mxu0 %v422
        %798 = vmatmul.mubr.bf16.gmra.mxu0 %v421
        %v799 = vpop.f32.mrf.mxu0
        %v800 = vadd.f32 0.0, %v799
        %v801 = vpop.f32.mrf.mxu0
        %v802 = vpop.f32.mrf.mxu0
        %v803 = vadd.f32 0.0, %v802
        %v804 = vpop.f32.mrf.mxu0
        %805 = vmatprep.mubr.bf16.mxu0 %v426
        %806 = vmatmul.mubr.bf16.gmra.mxu0 %v425
        %v807 = vpop.f32.mrf.mxu0
        %v808 = vadd.f32 0.0, %v807
        %v809 = vpop.f32.mrf.mxu0
        %v810 = vpop.f32.mrf.mxu0
        %v811 = vadd.f32 0.0, %v810
        %v812 = vpop.f32.mrf.mxu0
        %813 = vmatprep.mubr.bf16.mxu0 %v430
        %814 = vmatmul.mubr.bf16.gmra.mxu0 %v429
        %v815 = vpop.f32.mrf.mxu0
        %v816 = vadd.f32 0.0, %v815
        %v817 = vpop.f32.mrf.mxu0
        %v818 = vpop.f32.mrf.mxu0
        %v819 = vadd.f32 0.0, %v818
        %v820 = vpop.f32.mrf.mxu0
        %821 = vmatprep.mubr.bf16.mxu0 %v434
        %822 = vmatmul.mubr.bf16.gmra.mxu0 %v433
        %v823 = vpop.f32.mrf.mxu0
        %v824 = vadd.f32 0.0, %v823
        %v825 = vpop.f32.mrf.mxu0
        %v826 = vpop.f32.mrf.mxu0
        %v827 = vadd.f32 0.0, %v826
        %v828 = vpop.f32.mrf.mxu0
        %829 = vmatprep.mubr.bf16.mxu0 %v438
        %830 = vmatmul.mubr.bf16.gmra.mxu0 %v437
        %v831 = vpop.f32.mrf.mxu0
        %v832 = vadd.f32 0.0, %v831
        %v833 = vpop.f32.mrf.mxu0
        %v834 = vpop.f32.mrf.mxu0
        %v835 = vadd.f32 0.0, %v834
        %v836 = vpop.f32.mrf.mxu0
        %837 = vmatprep.mubr.bf16.mxu0 %v442
        %838 = vmatmul.mubr.bf16.gmra.mxu0 %v441
        %v839 = vpop.f32.mrf.mxu0
        %v840 = vadd.f32 0.0, %v839
        %v841 = vpop.f32.mrf.mxu0
        %v842 = vpop.f32.mrf.mxu0
        %v843 = vadd.f32 0.0, %v842
        %v844 = vpop.f32.mrf.mxu0
        %845 = vmatprep.mubr.bf16.mxu0 %v446
        %846 = vmatmul.mubr.bf16.gmra.mxu0 %v445
        %v847 = vpop.f32.mrf.mxu0
        %v848 = vadd.f32 0.0, %v847
        %v849 = vpop.f32.mrf.mxu0
        %v850 = vpop.f32.mrf.mxu0
        %v851 = vadd.f32 0.0, %v850
        %v852 = vpop.f32.mrf.mxu0
        %853 = vmatprep.mubr.bf16.mxu0 %v450
        %854 = vmatmul.mubr.bf16.gmra.mxu0 %v449
        %v855 = vpop.f32.mrf.mxu0
        %v856 = vadd.f32 0.0, %v855
        %v857 = vpop.f32.mrf.mxu0
        %v858 = vpop.f32.mrf.mxu0
        %v859 = vadd.f32 0.0, %v858
        %v860 = vpop.f32.mrf.mxu0
        %861 = vmatprep.mubr.bf16.mxu0 %v454
        %862 = vmatmul.mubr.bf16.gmra.mxu0 %v453
        %v863 = vpop.f32.mrf.mxu0
        %v864 = vadd.f32 0.0, %v863
        %v865 = vpop.f32.mrf.mxu0
        %v866 = vpop.f32.mrf.mxu0
        %v867 = vadd.f32 0.0, %v866
        %v868 = vpop.f32.mrf.mxu0
        %869 = vmatprep.mubr.bf16.mxu0 %v458
        %870 = vmatmul.mubr.bf16.gmra.mxu0 %v457
        %v871 = vpop.f32.mrf.mxu0
        %v872 = vadd.f32 0.0, %v871
        %v873 = vpop.f32.mrf.mxu0
        %v874 = vpop.f32.mrf.mxu0
        %v875 = vadd.f32 0.0, %v874
        %v876 = vpop.f32.mrf.mxu0
        %877 = vdwg.mxu0
        %878 = vmatprep.subr.bf16.mxu0 0
        %879 = vmatpush1.bf16.msra.mxu0 %v676
        %880 = vmatprep.subr.bf16.mxu0 0
        %881 = vmatpush1.bf16.msra.mxu0 %v675
        %882 = vmatprep.subr.bf16.mxu0 0
        %883 = vmatpush1.bf16.msra.mxu0 %v674
        %884 = vmatprep.subr.bf16.mxu0 0
        %885 = vmatpush1.bf16.msra.mxu0 %v673
        %886 = vmatprep.subr.bf16.mxu0 0
        %887 = vmatpush1.bf16.msra.mxu0 %v672
        %888 = vmatprep.subr.bf16.mxu0 0
        %889 = vmatpush1.bf16.msra.mxu0 %v671
        %890 = vmatprep.subr.bf16.mxu0 0
        %891 = vmatpush1.bf16.msra.mxu0 %v670
        %892 = vmatprep.subr.bf16.mxu0 0
        %893 = vmatpush1.bf16.msra.mxu0 %v669
        %894 = vmatprep.subr.bf16.mxu0 0
        %895 = vmatpush2.bf16.msra.mxu0 %v684
        %896 = vmatprep.subr.bf16.mxu0 0
        %897 = vmatpush2.bf16.msra.mxu0 %v683
        %898 = vmatprep.subr.bf16.mxu0 0
        %899 = vmatpush2.bf16.msra.mxu0 %v682
        %900 = vmatprep.subr.bf16.mxu0 0
        %901 = vmatpush2.bf16.msra.mxu0 %v681
        %902 = vmatprep.subr.bf16.mxu0 0
        %903 = vmatpush2.bf16.msra.mxu0 %v680
        %904 = vmatprep.subr.bf16.mxu0 0
        %905 = vmatpush2.bf16.msra.mxu0 %v679
        %906 = vmatprep.subr.bf16.mxu0 0
        %907 = vmatpush2.bf16.msra.mxu0 %v678
        %908 = vmatprep.subr.bf16.mxu0 0
        %909 = vmatpush2.bf16.msra.mxu0 %v677
        %910 = vmatprep.mubr.bf16.mxu0 %v400
        %911 = vmatmul.mubr.bf16.gmra.mxu0 %v399
        %v912 = vpop.f32.mrf.mxu0
        %v913 = vadd.f32 %v752, %v912
        %v914 = vpop.f32.mrf.mxu0
        %v915 = vpop.f32.mrf.mxu0
        %v916 = vadd.f32 %v755, %v915
        %v917 = vpop.f32.mrf.mxu0
        %918 = vmatprep.mubr.bf16.mxu0 %v404
        %919 = vmatmul.mubr.bf16.gmra.mxu0 %v403
        %v920 = vpop.f32.mrf.mxu0
        %v921 = vadd.f32 %v760, %v920
        %v922 = vpop.f32.mrf.mxu0
        %v923 = vpop.f32.mrf.mxu0
        %v924 = vadd.f32 %v763, %v923
        %v925 = vpop.f32.mrf.mxu0
        %926 = vmatprep.mubr.bf16.mxu0 %v408
        %927 = vmatmul.mubr.bf16.gmra.mxu0 %v407
        %v928 = vpop.f32.mrf.mxu0
        %v929 = vadd.f32 %v768, %v928
        %v930 = vpop.f32.mrf.mxu0
        %v931 = vpop.f32.mrf.mxu0
        %v932 = vadd.f32 %v771, %v931
        %v933 = vpop.f32.mrf.mxu0
        %934 = vmatprep.mubr.bf16.mxu0 %v412
        %935 = vmatmul.mubr.bf16.gmra.mxu0 %v411
        %v936 = vpop.f32.mrf.mxu0
        %v937 = vadd.f32 %v776, %v936
        %v938 = vpop.f32.mrf.mxu0
        %v939 = vpop.f32.mrf.mxu0
        %v940 = vadd.f32 %v779, %v939
        %v941 = vpop.f32.mrf.mxu0
        %942 = vmatprep.mubr.bf16.mxu0 %v416
        %943 = vmatmul.mubr.bf16.gmra.mxu0 %v415
        %v944 = vpop.f32.mrf.mxu0
        %v945 = vadd.f32 %v784, %v944
        %v946 = vpop.f32.mrf.mxu0
        %v947 = vpop.f32.mrf.mxu0
        %v948 = vadd.f32 %v787, %v947
        %v949 = vpop.f32.mrf.mxu0
        %950 = vmatprep.mubr.bf16.mxu0 %v420
        %951 = vmatmul.mubr.bf16.gmra.mxu0 %v419
        %v952 = vpop.f32.mrf.mxu0
        %v953 = vadd.f32 %v792, %v952
        %v954 = vpop.f32.mrf.mxu0
        %v955 = vpop.f32.mrf.mxu0
        %v956 = vadd.f32 %v795, %v955
        %v957 = vpop.f32.mrf.mxu0
        %958 = vmatprep.mubr.bf16.mxu0 %v424
        %959 = vmatmul.mubr.bf16.gmra.mxu0 %v423
        %v960 = vpop.f32.mrf.mxu0
        %v961 = vadd.f32 %v800, %v960
        %v962 = vpop.f32.mrf.mxu0
        %v963 = vpop.f32.mrf.mxu0
        %v964 = vadd.f32 %v803, %v963
        %v965 = vpop.f32.mrf.mxu0
        %966 = vmatprep.mubr.bf16.mxu0 %v428
        %967 = vmatmul.mubr.bf16.gmra.mxu0 %v427
        %v968 = vpop.f32.mrf.mxu0
        %v969 = vadd.f32 %v808, %v968
        %v970 = vpop.f32.mrf.mxu0
        %v971 = vpop.f32.mrf.mxu0
        %v972 = vadd.f32 %v811, %v971
        %v973 = vpop.f32.mrf.mxu0
        %974 = vmatprep.mubr.bf16.mxu0 %v432
        %975 = vmatmul.mubr.bf16.gmra.mxu0 %v431
        %v976 = vpop.f32.mrf.mxu0
        %v977 = vadd.f32 %v816, %v976
        %v978 = vpop.f32.mrf.mxu0
        %v979 = vpop.f32.mrf.mxu0
        %v980 = vadd.f32 %v819, %v979
        %v981 = vpop.f32.mrf.mxu0
        %982 = vmatprep.mubr.bf16.mxu0 %v436
        %983 = vmatmul.mubr.bf16.gmra.mxu0 %v435
        %v984 = vpop.f32.mrf.mxu0
        %v985 = vadd.f32 %v824, %v984
        %v986 = vpop.f32.mrf.mxu0
        %v987 = vpop.f32.mrf.mxu0
        %v988 = vadd.f32 %v827, %v987
        %v989 = vpop.f32.mrf.mxu0
        %990 = vmatprep.mubr.bf16.mxu0 %v440
        %991 = vmatmul.mubr.bf16.gmra.mxu0 %v439
        %v992 = vpop.f32.mrf.mxu0
        %v993 = vadd.f32 %v832, %v992
        %v994 = vpop.f32.mrf.mxu0
        %v995 = vpop.f32.mrf.mxu0
        %v996 = vadd.f32 %v835, %v995
        %v997 = vpop.f32.mrf.mxu0
        %998 = vmatprep.mubr.bf16.mxu0 %v444
        %999 = vmatmul.mubr.bf16.gmra.mxu0 %v443
        %v1000 = vpop.f32.mrf.mxu0
        %v1001 = vadd.f32 %v840, %v1000
        %v1002 = vpop.f32.mrf.mxu0
        %v1003 = vpop.f32.mrf.mxu0
        %v1004 = vadd.f32 %v843, %v1003
        %v1005 = vpop.f32.mrf.mxu0
        %1006 = vmatprep.mubr.bf16.mxu0 %v448
        %1007 = vmatmul.mubr.bf16.gmra.mxu0 %v447
        %v1008 = vpop.f32.mrf.mxu0
        %v1009 = vadd.f32 %v848, %v1008
        %v1010 = vpop.f32.mrf.mxu0
        %v1011 = vpop.f32.mrf.mxu0
        %v1012 = vadd.f32 %v851, %v1011
        %v1013 = vpop.f32.mrf.mxu0
        %1014 = vmatprep.mubr.bf16.mxu0 %v452
        %1015 = vmatmul.mubr.bf16.gmra.mxu0 %v451
        %v1016 = vpop.f32.mrf.mxu0
        %v1017 = vadd.f32 %v856, %v1016
        %v1018 = vpop.f32.mrf.mxu0
        %v1019 = vpop.f32.mrf.mxu0
        %v1020 = vadd.f32 %v859, %v1019
        %v1021 = vpop.f32.mrf.mxu0
        %1022 = vmatprep.mubr.bf16.mxu0 %v456
        %1023 = vmatmul.mubr.bf16.gmra.mxu0 %v455
        %v1024 = vpop.f32.mrf.mxu0
        %v1025 = vadd.f32 %v864, %v1024
        %v1026 = vpop.f32.mrf.mxu0
        %v1027 = vpop.f32.mrf.mxu0
        %v1028 = vadd.f32 %v867, %v1027
        %v1029 = vpop.f32.mrf.mxu0
        %1030 = vmatprep.mubr.bf16.mxu0 %v460
        %1031 = vmatmul.mubr.bf16.gmra.mxu0 %v459
        %v1032 = vpop.f32.mrf.mxu0
        %v1033 = vadd.f32 %v872, %v1032
        %v1034 = vpop.f32.mrf.mxu0
        %v1035 = vpop.f32.mrf.mxu0
        %v1036 = vadd.f32 %v875, %v1035
        %v1037 = vpop.f32.mrf.mxu0
        %1038 = vdwg.mxu0
        %v1039 = vld [vmem:[%s349] sm:$0xff]
        %v1040 = vld [vmem:[%s349 + $0x8] sm:$0xff]
        %v1041 = vld [vmem:[%s349 + $0x10] sm:$0xff]
        %v1042 = vld [vmem:[%s349 + $0x18] sm:$0xff]
        %v1043 = vld [vmem:[%s349 + $0x20] sm:$0xff]
        %v1044 = vld [vmem:[%s349 + $0x28] sm:$0xff]
        %v1045 = vld [vmem:[%s349 + $0x30] sm:$0xff]
        %v1046 = vld [vmem:[%s349 + $0x38] sm:$0xff]
        %v1047 = vld [vmem:[%s349 + $0x40] sm:$0xff]
        %v1048 = vld [vmem:[%s349 + $0x48] sm:$0xff]
        %v1049 = vld [vmem:[%s349 + $0x50] sm:$0xff]
        %v1050 = vld [vmem:[%s349 + $0x58] sm:$0xff]
        %v1051 = vld [vmem:[%s349 + $0x60] sm:$0xff]
        %v1052 = vld [vmem:[%s349 + $0x68] sm:$0xff]
        %v1053 = vld [vmem:[%s349 + $0x70] sm:$0xff]
        %v1054 = vld [vmem:[%s349 + $0x78] sm:$0xff]
        %v1055 = vld [vmem:[%s349 + $0x80] sm:$0xff]
        %v1056 = vld [vmem:[%s349 + $0x88] sm:$0xff]
        %v1057 = vld [vmem:[%s349 + $0x90] sm:$0xff]
        %v1058 = vld [vmem:[%s349 + $0x98] sm:$0xff]
        %v1059 = vld [vmem:[%s349 + $0xa0] sm:$0xff]
        %v1060 = vld [vmem:[%s349 + $0xa8] sm:$0xff]
        %v1061 = vld [vmem:[%s349 + $0xb0] sm:$0xff]
        %v1062 = vld [vmem:[%s349 + $0xb8] sm:$0xff]
        %v1063 = vld [vmem:[%s349 + $0xc0] sm:$0xff]
        %v1064 = vld [vmem:[%s349 + $0xc8] sm:$0xff]
        %v1065 = vld [vmem:[%s349 + $0xd0] sm:$0xff]
        %v1066 = vld [vmem:[%s349 + $0xd8] sm:$0xff]
        %v1067 = vld [vmem:[%s349 + $0xe0] sm:$0xff]
        %v1068 = vld [vmem:[%s349 + $0xe8] sm:$0xff]
        %v1069 = vld [vmem:[%s349 + $0xf0] sm:$0xff]
        %v1070 = vld [vmem:[%s349 + $0xf8] sm:$0xff]
        %1072 = vset.pattern.permute.xlu0 0
        %1073 = vperm.xlu0 %1072, %v1039
        %v1074 = vpop.permute.xlu0 %1073
        %1077 = vset.pattern.permute.xlu0 0
        %1078 = vperm.xlu0 %1077, %v1040
        %v1079 = vpop.permute.xlu0 %1078
        %1082 = vset.pattern.permute.xlu0 0
        %1083 = vperm.xlu0 %1082, %v1041
        %v1084 = vpop.permute.xlu0 %1083
        %1087 = vset.pattern.permute.xlu0 0
        %1088 = vperm.xlu0 %1087, %v1042
        %v1089 = vpop.permute.xlu0 %1088
        %1092 = vset.pattern.permute.xlu0 0
        %1093 = vperm.xlu0 %1092, %v1043
        %v1094 = vpop.permute.xlu0 %1093
        %1097 = vset.pattern.permute.xlu0 0
        %1098 = vperm.xlu0 %1097, %v1044
        %v1099 = vpop.permute.xlu0 %1098
        %1102 = vset.pattern.permute.xlu0 0
        %1103 = vperm.xlu0 %1102, %v1045
        %v1104 = vpop.permute.xlu0 %1103
        %1107 = vset.pattern.permute.xlu0 0
        %1108 = vperm.xlu0 %1107, %v1046
        %v1109 = vpop.permute.xlu0 %1108
        %1112 = vset.pattern.permute.xlu0 0
        %1113 = vperm.xlu0 %1112, %v1047
        %v1114 = vpop.permute.xlu0 %1113
        %1117 = vset.pattern.permute.xlu0 0
        %1118 = vperm.xlu0 %1117, %v1048
        %v1119 = vpop.permute.xlu0 %1118
        %1122 = vset.pattern.permute.xlu0 0
        %1123 = vperm.xlu0 %1122, %v1049
        %v1124 = vpop.permute.xlu0 %1123
        %1127 = vset.pattern.permute.xlu0 0
        %1128 = vperm.xlu0 %1127, %v1050
        %v1129 = vpop.permute.xlu0 %1128
        %1132 = vset.pattern.permute.xlu0 0
        %1133 = vperm.xlu0 %1132, %v1051
        %v1134 = vpop.permute.xlu0 %1133
        %1137 = vset.pattern.permute.xlu0 0
        %1138 = vperm.xlu0 %1137, %v1052
        %v1139 = vpop.permute.xlu0 %1138
        %1142 = vset.pattern.permute.xlu0 0
        %1143 = vperm.xlu0 %1142, %v1053
        %v1144 = vpop.permute.xlu0 %1143
        %1147 = vset.pattern.permute.xlu0 0
        %1148 = vperm.xlu0 %1147, %v1054
        %v1149 = vpop.permute.xlu0 %1148
        %1152 = vset.pattern.permute.xlu0 0
        %1153 = vperm.xlu0 %1152, %v1055
        %v1154 = vpop.permute.xlu0 %1153
        %1157 = vset.pattern.permute.xlu0 0
        %1158 = vperm.xlu0 %1157, %v1056
        %v1159 = vpop.permute.xlu0 %1158
        %1162 = vset.pattern.permute.xlu0 0
        %1163 = vperm.xlu0 %1162, %v1057
        %v1164 = vpop.permute.xlu0 %1163
        %1167 = vset.pattern.permute.xlu0 0
        %1168 = vperm.xlu0 %1167, %v1058
        %v1169 = vpop.permute.xlu0 %1168
        %1172 = vset.pattern.permute.xlu0 0
        %1173 = vperm.xlu0 %1172, %v1059
        %v1174 = vpop.permute.xlu0 %1173
        %1177 = vset.pattern.permute.xlu0 0
        %1178 = vperm.xlu0 %1177, %v1060
        %v1179 = vpop.permute.xlu0 %1178
        %1182 = vset.pattern.permute.xlu0 0
        %1183 = vperm.xlu0 %1182, %v1061
        %v1184 = vpop.permute.xlu0 %1183
        %1187 = vset.pattern.permute.xlu0 0
        %1188 = vperm.xlu0 %1187, %v1062
        %v1189 = vpop.permute.xlu0 %1188
        %1192 = vset.pattern.permute.xlu0 0
        %1193 = vperm.xlu0 %1192, %v1063
        %v1194 = vpop.permute.xlu0 %1193
        %1197 = vset.pattern.permute.xlu0 0
        %1198 = vperm.xlu0 %1197, %v1064
        %v1199 = vpop.permute.xlu0 %1198
        %1202 = vset.pattern.permute.xlu0 0
        %1203 = vperm.xlu0 %1202, %v1065
        %v1204 = vpop.permute.xlu0 %1203
        %1207 = vset.pattern.permute.xlu0 0
        %1208 = vperm.xlu0 %1207, %v1066
        %v1209 = vpop.permute.xlu0 %1208
        %1212 = vset.pattern.permute.xlu0 0
        %1213 = vperm.xlu0 %1212, %v1067
        %v1214 = vpop.permute.xlu0 %1213
        %1217 = vset.pattern.permute.xlu0 0
        %1218 = vperm.xlu0 %1217, %v1068
        %v1219 = vpop.permute.xlu0 %1218
        %1222 = vset.pattern.permute.xlu0 0
        %1223 = vperm.xlu0 %1222, %v1069
        %v1224 = vpop.permute.xlu0 %1223
        %1227 = vset.pattern.permute.xlu0 0
        %1228 = vperm.xlu0 %1227, %v1070
        %v1229 = vpop.permute.xlu0 %1228
        %v1231 = vmul.f32 %v1074, %v913
        %v1232 = vmul.f32 %v1079, %v916
        %v1233 = vmul.f32 %v1084, %v921
        %v1234 = vmul.f32 %v1089, %v924
        %v1235 = vmul.f32 %v1094, %v929
        %v1236 = vmul.f32 %v1099, %v932
        %v1237 = vmul.f32 %v1104, %v937
        %v1238 = vmul.f32 %v1109, %v940
        %v1239 = vmul.f32 %v1114, %v945
        %v1240 = vmul.f32 %v1119, %v948
        %v1241 = vmul.f32 %v1124, %v953
        %v1242 = vmul.f32 %v1129, %v956
        %v1243 = vmul.f32 %v1134, %v961
        %v1244 = vmul.f32 %v1139, %v964
        %v1245 = vmul.f32 %v1144, %v969
        %v1246 = vmul.f32 %v1149, %v972
        %v1247 = vmul.f32 %v1154, %v977
        %v1248 = vmul.f32 %v1159, %v980
        %v1249 = vmul.f32 %v1164, %v985
        %v1250 = vmul.f32 %v1169, %v988
        %v1251 = vmul.f32 %v1174, %v993
        %v1252 = vmul.f32 %v1179, %v996
        %v1253 = vmul.f32 %v1184, %v1001
        %v1254 = vmul.f32 %v1189, %v1004
        %v1255 = vmul.f32 %v1194, %v1009
        %v1256 = vmul.f32 %v1199, %v1012
        %v1257 = vmul.f32 %v1204, %v1017
        %v1258 = vmul.f32 %v1209, %v1020
        %v1259 = vmul.f32 %v1214, %v1025
        %v1260 = vmul.f32 %v1219, %v1028
        %v1261 = vmul.f32 %v1224, %v1033
        %v1262 = vmul.f32 %v1229, %v1036
        %v1263 = vld [vmem:[%s4] sm:$0x1]
        %v1265 = vlaneseq
        %v1266 = vshrl.u32 %v1265, 7
        %v1267 = vsub.s32 0, %v1266
        %v1268 = vrot.slane %v1263, %v1267
        %v1270 = vadd.f32 %v1231, %v1268
        %v1271 = vadd.f32 %v1232, %v1268
        %v1272 = vadd.f32 %v1233, %v1268
        %v1273 = vadd.f32 %v1234, %v1268
        %v1274 = vadd.f32 %v1235, %v1268
        %v1275 = vadd.f32 %v1236, %v1268
        %v1276 = vadd.f32 %v1237, %v1268
        %v1277 = vadd.f32 %v1238, %v1268
        %v1278 = vadd.f32 %v1239, %v1268
        %v1279 = vadd.f32 %v1240, %v1268
        %v1280 = vadd.f32 %v1241, %v1268
        %v1281 = vadd.f32 %v1242, %v1268
        %v1282 = vadd.f32 %v1243, %v1268
        %v1283 = vadd.f32 %v1244, %v1268
        %v1284 = vadd.f32 %v1245, %v1268
        %v1285 = vadd.f32 %v1246, %v1268
        %v1286 = vadd.f32 %v1247, %v1268
        %v1287 = vadd.f32 %v1248, %v1268
        %v1288 = vadd.f32 %v1249, %v1268
        %v1289 = vadd.f32 %v1250, %v1268
        %v1290 = vadd.f32 %v1251, %v1268
        %v1291 = vadd.f32 %v1252, %v1268
        %v1292 = vadd.f32 %v1253, %v1268
        %v1293 = vadd.f32 %v1254, %v1268
        %v1294 = vadd.f32 %v1255, %v1268
        %v1295 = vadd.f32 %v1256, %v1268
        %v1296 = vadd.f32 %v1257, %v1268
        %v1297 = vadd.f32 %v1258, %v1268
        %v1298 = vadd.f32 %v1259, %v1268
        %v1299 = vadd.f32 %v1260, %v1268
        %v1300 = vadd.f32 %v1261, %v1268
        %v1301 = vadd.f32 %v1262, %v1268
        %v1302 = vmax.f32 %v1270, 0.0
        %v1303 = vmax.f32 %v1271, 0.0
        %v1304 = vmax.f32 %v1272, 0.0
        %v1305 = vmax.f32 %v1273, 0.0
        %v1306 = vmax.f32 %v1274, 0.0
        %v1307 = vmax.f32 %v1275, 0.0
        %v1308 = vmax.f32 %v1276, 0.0
        %v1309 = vmax.f32 %v1277, 0.0
        %v1310 = vmax.f32 %v1278, 0.0
        %v1311 = vmax.f32 %v1279, 0.0
        %v1312 = vmax.f32 %v1280, 0.0
        %v1313 = vmax.f32 %v1281, 0.0
        %v1314 = vmax.f32 %v1282, 0.0
        %v1315 = vmax.f32 %v1283, 0.0
        %v1316 = vmax.f32 %v1284, 0.0
        %v1317 = vmax.f32 %v1285, 0.0
        %v1318 = vmax.f32 %v1286, 0.0
        %v1319 = vmax.f32 %v1287, 0.0
        %v1320 = vmax.f32 %v1288, 0.0
        %v1321 = vmax.f32 %v1289, 0.0
        %v1322 = vmax.f32 %v1290, 0.0
        %v1323 = vmax.f32 %v1291, 0.0
        %v1324 = vmax.f32 %v1292, 0.0
        %v1325 = vmax.f32 %v1293, 0.0
        %v1326 = vmax.f32 %v1294, 0.0
        %v1327 = vmax.f32 %v1295, 0.0
        %v1328 = vmax.f32 %v1296, 0.0
        %v1329 = vmax.f32 %v1297, 0.0
        %v1330 = vmax.f32 %v1298, 0.0
        %v1331 = vmax.f32 %v1299, 0.0
        %v1332 = vmax.f32 %v1300, 0.0
        %v1333 = vmax.f32 %v1301, 0.0
        %v1334 = vld [vmem:[%s361] sm:$0xf]
        %v1335 = vld [vmem:[%s361 + $0x4] sm:$0xf]
        %v1336 = vld [vmem:[%s361 + $0x8] sm:$0xf]
        %v1337 = vld [vmem:[%s361 + $0xc] sm:$0xf]
        %v1338 = vld [vmem:[%s361 + $0x10] sm:$0xf]
        %v1339 = vld [vmem:[%s361 + $0x14] sm:$0xf]
        %v1340 = vld [vmem:[%s361 + $0x18] sm:$0xf]
        %v1341 = vld [vmem:[%s361 + $0x1c] sm:$0xf]
        %v1342 = vld [vmem:[%s361 + $0x20] sm:$0xf]
        %v1343 = vld [vmem:[%s361 + $0x24] sm:$0xf]
        %v1344 = vld [vmem:[%s361 + $0x28] sm:$0xf]
        %v1345 = vld [vmem:[%s361 + $0x2c] sm:$0xf]
        %v1346 = vld [vmem:[%s361 + $0x30] sm:$0xf]
        %v1347 = vld [vmem:[%s361 + $0x34] sm:$0xf]
        %v1348 = vld [vmem:[%s361 + $0x38] sm:$0xf]
        %v1349 = vld [vmem:[%s361 + $0x3c] sm:$0xf]
        %v1350 = vld [vmem:[%s361 + $0x40] sm:$0xf]
        %v1351 = vld [vmem:[%s361 + $0x44] sm:$0xf]
        %v1352 = vld [vmem:[%s361 + $0x48] sm:$0xf]
        %v1353 = vld [vmem:[%s361 + $0x4c] sm:$0xf]
        %v1354 = vld [vmem:[%s361 + $0x50] sm:$0xf]
        %v1355 = vld [vmem:[%s361 + $0x54] sm:$0xf]
        %v1356 = vld [vmem:[%s361 + $0x58] sm:$0xf]
        %v1357 = vld [vmem:[%s361 + $0x5c] sm:$0xf]
        %v1358 = vld [vmem:[%s361 + $0x60] sm:$0xf]
        %v1359 = vld [vmem:[%s361 + $0x64] sm:$0xf]
        %v1360 = vld [vmem:[%s361 + $0x68] sm:$0xf]
        %v1361 = vld [vmem:[%s361 + $0x6c] sm:$0xf]
        %v1362 = vld [vmem:[%s361 + $0x70] sm:$0xf]
        %v1363 = vld [vmem:[%s361 + $0x74] sm:$0xf]
        %v1364 = vld [vmem:[%s361 + $0x78] sm:$0xf]
        %v1365 = vld [vmem:[%s361 + $0x7c] sm:$0xf]
        %v1366 = vunpack.c.l.bf16 %v1334
        %v1367 = vunpack.c.l.bf16 %v1335
        %v1368 = vunpack.c.l.bf16 %v1336
        %v1369 = vunpack.c.l.bf16 %v1337
        %v1370 = vunpack.c.l.bf16 %v1338
        %v1371 = vunpack.c.l.bf16 %v1339
        %v1372 = vunpack.c.l.bf16 %v1340
        %v1373 = vunpack.c.l.bf16 %v1341
        %v1374 = vunpack.c.l.bf16 %v1342
        %v1375 = vunpack.c.l.bf16 %v1343
        %v1376 = vunpack.c.l.bf16 %v1344
        %v1377 = vunpack.c.l.bf16 %v1345
        %v1378 = vunpack.c.l.bf16 %v1346
        %v1379 = vunpack.c.l.bf16 %v1347
        %v1380 = vunpack.c.l.bf16 %v1348
        %v1381 = vunpack.c.l.bf16 %v1349
        %v1382 = vunpack.c.l.bf16 %v1350
        %v1383 = vunpack.c.l.bf16 %v1351
        %v1384 = vunpack.c.l.bf16 %v1352
        %v1385 = vunpack.c.l.bf16 %v1353
        %v1386 = vunpack.c.l.bf16 %v1354
        %v1387 = vunpack.c.l.bf16 %v1355
        %v1388 = vunpack.c.l.bf16 %v1356
        %v1389 = vunpack.c.l.bf16 %v1357
        %v1390 = vunpack.c.l.bf16 %v1358
        %v1391 = vunpack.c.l.bf16 %v1359
        %v1392 = vunpack.c.l.bf16 %v1360
        %v1393 = vunpack.c.l.bf16 %v1361
        %v1394 = vunpack.c.l.bf16 %v1362
        %v1395 = vunpack.c.l.bf16 %v1363
        %v1396 = vunpack.c.l.bf16 %v1364
        %v1397 = vunpack.c.l.bf16 %v1365
        %v1398 = vmul.f32 %v1302, %v1366
        %v1399 = vmul.f32 %v1303, %v1367
        %v1400 = vmul.f32 %v1304, %v1368
        %v1401 = vmul.f32 %v1305, %v1369
        %v1402 = vmul.f32 %v1306, %v1370
        %v1403 = vmul.f32 %v1307, %v1371
        %v1404 = vmul.f32 %v1308, %v1372
        %v1405 = vmul.f32 %v1309, %v1373
        %v1406 = vmul.f32 %v1310, %v1374
        %v1407 = vmul.f32 %v1311, %v1375
        %v1408 = vmul.f32 %v1312, %v1376
        %v1409 = vmul.f32 %v1313, %v1377
        %v1410 = vmul.f32 %v1314, %v1378
        %v1411 = vmul.f32 %v1315, %v1379
        %v1412 = vmul.f32 %v1316, %v1380
        %v1413 = vmul.f32 %v1317, %v1381
        %v1414 = vmul.f32 %v1318, %v1382
        %v1415 = vmul.f32 %v1319, %v1383
        %v1416 = vmul.f32 %v1320, %v1384
        %v1417 = vmul.f32 %v1321, %v1385
        %v1418 = vmul.f32 %v1322, %v1386
        %v1419 = vmul.f32 %v1323, %v1387
        %v1420 = vmul.f32 %v1324, %v1388
        %v1421 = vmul.f32 %v1325, %v1389
        %v1422 = vmul.f32 %v1326, %v1390
        %v1423 = vmul.f32 %v1327, %v1391
        %v1424 = vmul.f32 %v1328, %v1392
        %v1425 = vmul.f32 %v1329, %v1393
        %v1426 = vmul.f32 %v1330, %v1394
        %v1427 = vmul.f32 %v1331, %v1395
        %v1428 = vmul.f32 %v1332, %v1396
        %v1429 = vmul.f32 %v1333, %v1397
        %v1430 = vpack.c.bf16 %v1399, %v1398
        %v1431 = vpack.c.bf16 %v1401, %v1400
        %v1432 = vpack.c.bf16 %v1403, %v1402
        %v1433 = vpack.c.bf16 %v1405, %v1404
        %v1434 = vpack.c.bf16 %v1407, %v1406
        %v1435 = vpack.c.bf16 %v1409, %v1408
        %v1436 = vpack.c.bf16 %v1411, %v1410
        %v1437 = vpack.c.bf16 %v1413, %v1412
        %v1438 = vpack.c.bf16 %v1415, %v1414
        %v1439 = vpack.c.bf16 %v1417, %v1416
        %v1440 = vpack.c.bf16 %v1419, %v1418
        %v1441 = vpack.c.bf16 %v1421, %v1420
        %v1442 = vpack.c.bf16 %v1423, %v1422
        %v1443 = vpack.c.bf16 %v1425, %v1424
        %v1444 = vpack.c.bf16 %v1427, %v1426
        %v1445 = vpack.c.bf16 %v1429, %v1428
        %v1446 = vld [vmem:[#allocation2] sm:$0xf]
        %v1447 = vld [vmem:[#allocation2 + $0x4] sm:$0xf]
        %v1448 = vld [vmem:[#allocation2 + $0x8] sm:$0xf]
        %v1449 = vld [vmem:[#allocation2 + $0xc] sm:$0xf]
        %v1450 = vld [vmem:[#allocation2 + $0x10] sm:$0xf]
        %v1451 = vld [vmem:[#allocation2 + $0x14] sm:$0xf]
        %v1452 = vld [vmem:[#allocation2 + $0x18] sm:$0xf]
        %v1453 = vld [vmem:[#allocation2 + $0x1c] sm:$0xf]
        %v1454 = vld [vmem:[#allocation2 + $0x20] sm:$0xf]
        %v1455 = vld [vmem:[#allocation2 + $0x24] sm:$0xf]
        %v1456 = vld [vmem:[#allocation2 + $0x28] sm:$0xf]
        %v1457 = vld [vmem:[#allocation2 + $0x2c] sm:$0xf]
        %v1458 = vld [vmem:[#allocation2 + $0x30] sm:$0xf]
        %v1459 = vld [vmem:[#allocation2 + $0x34] sm:$0xf]
        %v1460 = vld [vmem:[#allocation2 + $0x38] sm:$0xf]
        %v1461 = vld [vmem:[#allocation2 + $0x3c] sm:$0xf]
        %v1478 = vunpack.c.l.b16 %v1446
        %v1479 = vunpack.c.l.b16 %v1447
        %v1480 = vunpack.c.l.b16 %v1448
        %v1481 = vunpack.c.l.b16 %v1449
        %v1482 = vunpack.c.l.b16 %v1450
        %v1483 = vunpack.c.l.b16 %v1451
        %v1484 = vunpack.c.l.b16 %v1452
        %v1485 = vunpack.c.l.b16 %v1453
        %v1486 = vunpack.c.l.b16 %v1454
        %v1487 = vunpack.c.l.b16 %v1455
        %v1488 = vunpack.c.l.b16 %v1456
        %v1489 = vunpack.c.l.b16 %v1457
        %v1490 = vunpack.c.l.b16 %v1458
        %v1491 = vunpack.c.l.b16 %v1459
        %v1492 = vunpack.c.l.b16 %v1460
        %v1493 = vunpack.c.l.b16 %v1461
        %v1494 = vpack.c.b16 %v1479, %v1478
        %v1495 = vpack.c.b16 %v1481, %v1480
        %v1496 = vpack.c.b16 %v1483, %v1482
        %v1497 = vpack.c.b16 %v1485, %v1484
        %v1498 = vpack.c.b16 %v1487, %v1486
        %v1499 = vpack.c.b16 %v1489, %v1488
        %v1500 = vpack.c.b16 %v1491, %v1490
        %v1501 = vpack.c.b16 %v1493, %v1492
        %1510 = vmatprep.subr.bf16.mxu0 0
        %1511 = vmatpush1.bf16.msra.mxu0 %v1501
        %1512 = vmatprep.subr.bf16.mxu0 0
        %1513 = vmatpush1.bf16.msra.mxu0 %v1500
        %1514 = vmatprep.subr.bf16.mxu0 0
        %1515 = vmatpush1.bf16.msra.mxu0 %v1499
        %1516 = vmatprep.subr.bf16.mxu0 0
        %1517 = vmatpush1.bf16.msra.mxu0 %v1498
        %1518 = vmatprep.subr.bf16.mxu0 0
        %1519 = vmatpush1.bf16.msra.mxu0 %v1497
        %1520 = vmatprep.subr.bf16.mxu0 0
        %1521 = vmatpush1.bf16.msra.mxu0 %v1496
        %1522 = vmatprep.subr.bf16.mxu0 0
        %1523 = vmatpush1.bf16.msra.mxu0 %v1495
        %1524 = vmatprep.subr.bf16.mxu0 0
        %1525 = vmatpush1.bf16.msra.mxu0 %v1494
        %1526 = vmatprep.subr.bf16.mxu0 0
        %1527 = vmatpush2.bf16.msra.mxu0 0
        %1528 = vmatprep.subr.bf16.mxu0 0
        %1529 = vmatpush2.bf16.msra.mxu0 0
        %1530 = vmatprep.subr.bf16.mxu0 0
        %1531 = vmatpush2.bf16.msra.mxu0 0
        %1532 = vmatprep.subr.bf16.mxu0 0
        %1533 = vmatpush2.bf16.msra.mxu0 0
        %1534 = vmatprep.subr.bf16.mxu0 0
        %1535 = vmatpush2.bf16.msra.mxu0 0
        %1536 = vmatprep.subr.bf16.mxu0 0
        %1537 = vmatpush2.bf16.msra.mxu0 0
        %1538 = vmatprep.subr.bf16.mxu0 0
        %1539 = vmatpush2.bf16.msra.mxu0 0
        %1540 = vmatprep.subr.bf16.mxu0 0
        %1541 = vmatpush2.bf16.msra.mxu0 0
        %1542 = vmatprep.mubr.bf16.mxu0 0
        %1543 = vmatmul.mubr.bf16.gmra.mxu0 %v1430
        %v1544 = vpop.f32.mrf.mxu0
        %v1545 = vadd.f32 0.0, %v1544
        %v1546 = vpop.f32.mrf.mxu0
        %v1547 = vpop.f32.mrf.mxu0
        %v1548 = vadd.f32 0.0, %v1547
        %v1549 = vpop.f32.mrf.mxu0
        %1550 = vmatprep.mubr.bf16.mxu0 0
        %1551 = vmatmul.mubr.bf16.gmra.mxu0 %v1431
        %v1552 = vpop.f32.mrf.mxu0
        %v1553 = vadd.f32 0.0, %v1552
        %v1554 = vpop.f32.mrf.mxu0
        %v1555 = vpop.f32.mrf.mxu0
        %v1556 = vadd.f32 0.0, %v1555
        %v1557 = vpop.f32.mrf.mxu0
        %1558 = vmatprep.mubr.bf16.mxu0 0
        %1559 = vmatmul.mubr.bf16.gmra.mxu0 %v1432
        %v1560 = vpop.f32.mrf.mxu0
        %v1561 = vadd.f32 0.0, %v1560
        %v1562 = vpop.f32.mrf.mxu0
        %v1563 = vpop.f32.mrf.mxu0
        %v1564 = vadd.f32 0.0, %v1563
        %v1565 = vpop.f32.mrf.mxu0
        %1566 = vmatprep.mubr.bf16.mxu0 0
        %1567 = vmatmul.mubr.bf16.gmra.mxu0 %v1433
        %v1568 = vpop.f32.mrf.mxu0
        %v1569 = vadd.f32 0.0, %v1568
        %v1570 = vpop.f32.mrf.mxu0
        %v1571 = vpop.f32.mrf.mxu0
        %v1572 = vadd.f32 0.0, %v1571
        %v1573 = vpop.f32.mrf.mxu0
        %1574 = vmatprep.mubr.bf16.mxu0 0
        %1575 = vmatmul.mubr.bf16.gmra.mxu0 %v1434
        %v1576 = vpop.f32.mrf.mxu0
        %v1577 = vadd.f32 0.0, %v1576
        %v1578 = vpop.f32.mrf.mxu0
        %v1579 = vpop.f32.mrf.mxu0
        %v1580 = vadd.f32 0.0, %v1579
        %v1581 = vpop.f32.mrf.mxu0
        %1582 = vmatprep.mubr.bf16.mxu0 0
        %1583 = vmatmul.mubr.bf16.gmra.mxu0 %v1435
        %v1584 = vpop.f32.mrf.mxu0
        %v1585 = vadd.f32 0.0, %v1584
        %v1586 = vpop.f32.mrf.mxu0
        %v1587 = vpop.f32.mrf.mxu0
        %v1588 = vadd.f32 0.0, %v1587
        %v1589 = vpop.f32.mrf.mxu0
        %1590 = vmatprep.mubr.bf16.mxu0 0
        %1591 = vmatmul.mubr.bf16.gmra.mxu0 %v1436
        %v1592 = vpop.f32.mrf.mxu0
        %v1593 = vadd.f32 0.0, %v1592
        %v1594 = vpop.f32.mrf.mxu0
        %v1595 = vpop.f32.mrf.mxu0
        %v1596 = vadd.f32 0.0, %v1595
        %v1597 = vpop.f32.mrf.mxu0
        %1598 = vmatprep.mubr.bf16.mxu0 0
        %1599 = vmatmul.mubr.bf16.gmra.mxu0 %v1437
        %v1600 = vpop.f32.mrf.mxu0
        %v1601 = vadd.f32 0.0, %v1600
        %v1602 = vpop.f32.mrf.mxu0
        %v1603 = vpop.f32.mrf.mxu0
        %v1604 = vadd.f32 0.0, %v1603
        %v1605 = vpop.f32.mrf.mxu0
        %1606 = vmatprep.mubr.bf16.mxu0 0
        %1607 = vmatmul.mubr.bf16.gmra.mxu0 %v1438
        %v1608 = vpop.f32.mrf.mxu0
        %v1609 = vadd.f32 0.0, %v1608
        %v1610 = vpop.f32.mrf.mxu0
        %v1611 = vpop.f32.mrf.mxu0
        %v1612 = vadd.f32 0.0, %v1611
        %v1613 = vpop.f32.mrf.mxu0
        %1614 = vmatprep.mubr.bf16.mxu0 0
        %1615 = vmatmul.mubr.bf16.gmra.mxu0 %v1439
        %v1616 = vpop.f32.mrf.mxu0
        %v1617 = vadd.f32 0.0, %v1616
        %v1618 = vpop.f32.mrf.mxu0
        %v1619 = vpop.f32.mrf.mxu0
        %v1620 = vadd.f32 0.0, %v1619
        %v1621 = vpop.f32.mrf.mxu0
        %1622 = vmatprep.mubr.bf16.mxu0 0
        %1623 = vmatmul.mubr.bf16.gmra.mxu0 %v1440
        %v1624 = vpop.f32.mrf.mxu0
        %v1625 = vadd.f32 0.0, %v1624
        %v1626 = vpop.f32.mrf.mxu0
        %v1627 = vpop.f32.mrf.mxu0
        %v1628 = vadd.f32 0.0, %v1627
        %v1629 = vpop.f32.mrf.mxu0
        %1630 = vmatprep.mubr.bf16.mxu0 0
        %1631 = vmatmul.mubr.bf16.gmra.mxu0 %v1441
        %v1632 = vpop.f32.mrf.mxu0
        %v1633 = vadd.f32 0.0, %v1632
        %v1634 = vpop.f32.mrf.mxu0
        %v1635 = vpop.f32.mrf.mxu0
        %v1636 = vadd.f32 0.0, %v1635
        %v1637 = vpop.f32.mrf.mxu0
        %1638 = vmatprep.mubr.bf16.mxu0 0
        %1639 = vmatmul.mubr.bf16.gmra.mxu0 %v1442
        %v1640 = vpop.f32.mrf.mxu0
        %v1641 = vadd.f32 0.0, %v1640
        %v1642 = vpop.f32.mrf.mxu0
        %v1643 = vpop.f32.mrf.mxu0
        %v1644 = vadd.f32 0.0, %v1643
        %v1645 = vpop.f32.mrf.mxu0
        %1646 = vmatprep.mubr.bf16.mxu0 0
        %1647 = vmatmul.mubr.bf16.gmra.mxu0 %v1443
        %v1648 = vpop.f32.mrf.mxu0
        %v1649 = vadd.f32 0.0, %v1648
        %v1650 = vpop.f32.mrf.mxu0
        %v1651 = vpop.f32.mrf.mxu0
        %v1652 = vadd.f32 0.0, %v1651
        %v1653 = vpop.f32.mrf.mxu0
        %1654 = vmatprep.mubr.bf16.mxu0 0
        %1655 = vmatmul.mubr.bf16.gmra.mxu0 %v1444
        %v1656 = vpop.f32.mrf.mxu0
        %v1657 = vadd.f32 0.0, %v1656
        %v1658 = vpop.f32.mrf.mxu0
        %v1659 = vpop.f32.mrf.mxu0
        %v1660 = vadd.f32 0.0, %v1659
        %v1661 = vpop.f32.mrf.mxu0
        %1662 = vmatprep.mubr.bf16.mxu0 0
        %1663 = vmatmul.mubr.bf16.gmra.mxu0 %v1445
        %v1664 = vpop.f32.mrf.mxu0
        %v1665 = vadd.f32 0.0, %v1664
        %v1666 = vpop.f32.mrf.mxu0
        %v1667 = vpop.f32.mrf.mxu0
        %v1668 = vadd.f32 0.0, %v1667
        %v1669 = vpop.f32.mrf.mxu0
        %1670 = vdwg.mxu0
        %v1671 = vld [vmem:[%s355] sm:$0xff]
        %v1672 = vld [vmem:[%s355 + $0x8] sm:$0xff]
        %v1673 = vld [vmem:[%s355 + $0x10] sm:$0xff]
        %v1674 = vld [vmem:[%s355 + $0x18] sm:$0xff]
        %v1675 = vld [vmem:[%s355 + $0x20] sm:$0xff]
        %v1676 = vld [vmem:[%s355 + $0x28] sm:$0xff]
        %v1677 = vld [vmem:[%s355 + $0x30] sm:$0xff]
        %v1678 = vld [vmem:[%s355 + $0x38] sm:$0xff]
        %v1679 = vld [vmem:[%s355 + $0x40] sm:$0xff]
        %v1680 = vld [vmem:[%s355 + $0x48] sm:$0xff]
        %v1681 = vld [vmem:[%s355 + $0x50] sm:$0xff]
        %v1682 = vld [vmem:[%s355 + $0x58] sm:$0xff]
        %v1683 = vld [vmem:[%s355 + $0x60] sm:$0xff]
        %v1684 = vld [vmem:[%s355 + $0x68] sm:$0xff]
        %v1685 = vld [vmem:[%s355 + $0x70] sm:$0xff]
        %v1686 = vld [vmem:[%s355 + $0x78] sm:$0xff]
        %v1687 = vld [vmem:[%s355 + $0x80] sm:$0xff]
        %v1688 = vld [vmem:[%s355 + $0x88] sm:$0xff]
        %v1689 = vld [vmem:[%s355 + $0x90] sm:$0xff]
        %v1690 = vld [vmem:[%s355 + $0x98] sm:$0xff]
        %v1691 = vld [vmem:[%s355 + $0xa0] sm:$0xff]
        %v1692 = vld [vmem:[%s355 + $0xa8] sm:$0xff]
        %v1693 = vld [vmem:[%s355 + $0xb0] sm:$0xff]
        %v1694 = vld [vmem:[%s355 + $0xb8] sm:$0xff]
        %v1695 = vld [vmem:[%s355 + $0xc0] sm:$0xff]
        %v1696 = vld [vmem:[%s355 + $0xc8] sm:$0xff]
        %v1697 = vld [vmem:[%s355 + $0xd0] sm:$0xff]
        %v1698 = vld [vmem:[%s355 + $0xd8] sm:$0xff]
        %v1699 = vld [vmem:[%s355 + $0xe0] sm:$0xff]
        %v1700 = vld [vmem:[%s355 + $0xe8] sm:$0xff]
        %v1701 = vld [vmem:[%s355 + $0xf0] sm:$0xff]
        %v1702 = vld [vmem:[%s355 + $0xf8] sm:$0xff]
        %1704 = vset.pattern.permute.xlu0 0
        %1705 = vperm.xlu0 %1704, %v1671
        %v1706 = vpop.permute.xlu0 %1705
        %1709 = vset.pattern.permute.xlu0 0
        %1710 = vperm.xlu0 %1709, %v1672
        %v1711 = vpop.permute.xlu0 %1710
        %1714 = vset.pattern.permute.xlu0 0
        %1715 = vperm.xlu0 %1714, %v1673
        %v1716 = vpop.permute.xlu0 %1715
        %1719 = vset.pattern.permute.xlu0 0
        %1720 = vperm.xlu0 %1719, %v1674
        %v1721 = vpop.permute.xlu0 %1720
        %1724 = vset.pattern.permute.xlu0 0
        %1725 = vperm.xlu0 %1724, %v1675
        %v1726 = vpop.permute.xlu0 %1725
        %1729 = vset.pattern.permute.xlu0 0
        %1730 = vperm.xlu0 %1729, %v1676
        %v1731 = vpop.permute.xlu0 %1730
        %1734 = vset.pattern.permute.xlu0 0
        %1735 = vperm.xlu0 %1734, %v1677
        %v1736 = vpop.permute.xlu0 %1735
        %1739 = vset.pattern.permute.xlu0 0
        %1740 = vperm.xlu0 %1739, %v1678
        %v1741 = vpop.permute.xlu0 %1740
        %1744 = vset.pattern.permute.xlu0 0
        %1745 = vperm.xlu0 %1744, %v1679
        %v1746 = vpop.permute.xlu0 %1745
        %1749 = vset.pattern.permute.xlu0 0
        %1750 = vperm.xlu0 %1749, %v1680
        %v1751 = vpop.permute.xlu0 %1750
        %1754 = vset.pattern.permute.xlu0 0
        %1755 = vperm.xlu0 %1754, %v1681
        %v1756 = vpop.permute.xlu0 %1755
        %1759 = vset.pattern.permute.xlu0 0
        %1760 = vperm.xlu0 %1759, %v1682
        %v1761 = vpop.permute.xlu0 %1760
        %1764 = vset.pattern.permute.xlu0 0
        %1765 = vperm.xlu0 %1764, %v1683
        %v1766 = vpop.permute.xlu0 %1765
        %1769 = vset.pattern.permute.xlu0 0
        %1770 = vperm.xlu0 %1769, %v1684
        %v1771 = vpop.permute.xlu0 %1770
        %1774 = vset.pattern.permute.xlu0 0
        %1775 = vperm.xlu0 %1774, %v1685
        %v1776 = vpop.permute.xlu0 %1775
        %1779 = vset.pattern.permute.xlu0 0
        %1780 = vperm.xlu0 %1779, %v1686
        %v1781 = vpop.permute.xlu0 %1780
        %1784 = vset.pattern.permute.xlu0 0
        %1785 = vperm.xlu0 %1784, %v1687
        %v1786 = vpop.permute.xlu0 %1785
        %1789 = vset.pattern.permute.xlu0 0
        %1790 = vperm.xlu0 %1789, %v1688
        %v1791 = vpop.permute.xlu0 %1790
        %1794 = vset.pattern.permute.xlu0 0
        %1795 = vperm.xlu0 %1794, %v1689
        %v1796 = vpop.permute.xlu0 %1795
        %1799 = vset.pattern.permute.xlu0 0
        %1800 = vperm.xlu0 %1799, %v1690
        %v1801 = vpop.permute.xlu0 %1800
        %1804 = vset.pattern.permute.xlu0 0
        %1805 = vperm.xlu0 %1804, %v1691
        %v1806 = vpop.permute.xlu0 %1805
        %1809 = vset.pattern.permute.xlu0 0
        %1810 = vperm.xlu0 %1809, %v1692
        %v1811 = vpop.permute.xlu0 %1810
        %1814 = vset.pattern.permute.xlu0 0
        %1815 = vperm.xlu0 %1814, %v1693
        %v1816 = vpop.permute.xlu0 %1815
        %1819 = vset.pattern.permute.xlu0 0
        %1820 = vperm.xlu0 %1819, %v1694
        %v1821 = vpop.permute.xlu0 %1820
        %1824 = vset.pattern.permute.xlu0 0
        %1825 = vperm.xlu0 %1824, %v1695
        %v1826 = vpop.permute.xlu0 %1825
        %1829 = vset.pattern.permute.xlu0 0
        %1830 = vperm.xlu0 %1829, %v1696
        %v1831 = vpop.permute.xlu0 %1830
        %1834 = vset.pattern.permute.xlu0 0
        %1835 = vperm.xlu0 %1834, %v1697
        %v1836 = vpop.permute.xlu0 %1835
        %1839 = vset.pattern.permute.xlu0 0
        %1840 = vperm.xlu0 %1839, %v1698
        %v1841 = vpop.permute.xlu0 %1840
        %1844 = vset.pattern.permute.xlu0 0
        %1845 = vperm.xlu0 %1844, %v1699
        %v1846 = vpop.permute.xlu0 %1845
        %1849 = vset.pattern.permute.xlu0 0
        %1850 = vperm.xlu0 %1849, %v1700
        %v1851 = vpop.permute.xlu0 %1850
        %1854 = vset.pattern.permute.xlu0 0
        %1855 = vperm.xlu0 %1854, %v1701
        %v1856 = vpop.permute.xlu0 %1855
        %1859 = vset.pattern.permute.xlu0 0
        %1860 = vperm.xlu0 %1859, %v1702
        %v1861 = vpop.permute.xlu0 %1860
        %v1863 = vmul.f32 %v1706, %v1545
        %v1864 = vmul.f32 %v1711, %v1548
        %v1865 = vmul.f32 %v1716, %v1553
        %v1866 = vmul.f32 %v1721, %v1556
        %v1867 = vmul.f32 %v1726, %v1561
        %v1868 = vmul.f32 %v1731, %v1564
        %v1869 = vmul.f32 %v1736, %v1569
        %v1870 = vmul.f32 %v1741, %v1572
        %v1871 = vmul.f32 %v1746, %v1577
        %v1872 = vmul.f32 %v1751, %v1580
        %v1873 = vmul.f32 %v1756, %v1585
        %v1874 = vmul.f32 %v1761, %v1588
        %v1875 = vmul.f32 %v1766, %v1593
        %v1876 = vmul.f32 %v1771, %v1596
        %v1877 = vmul.f32 %v1776, %v1601
        %v1878 = vmul.f32 %v1781, %v1604
        %v1879 = vmul.f32 %v1786, %v1609
        %v1880 = vmul.f32 %v1791, %v1612
        %v1881 = vmul.f32 %v1796, %v1617
        %v1882 = vmul.f32 %v1801, %v1620
        %v1883 = vmul.f32 %v1806, %v1625
        %v1884 = vmul.f32 %v1811, %v1628
        %v1885 = vmul.f32 %v1816, %v1633
        %v1886 = vmul.f32 %v1821, %v1636
        %v1887 = vmul.f32 %v1826, %v1641
        %v1888 = vmul.f32 %v1831, %v1644
        %v1889 = vmul.f32 %v1836, %v1649
        %v1890 = vmul.f32 %v1841, %v1652
        %v1891 = vmul.f32 %v1846, %v1657
        %v1892 = vmul.f32 %v1851, %v1660
        %v1893 = vmul.f32 %v1856, %v1665
        %v1894 = vmul.f32 %v1861, %v1668
        %v1895 = vpack.c.bf16 %v1864, %v1863
        %v1896 = vpack.c.bf16 %v1866, %v1865
        %v1897 = vpack.c.bf16 %v1868, %v1867
        %v1898 = vpack.c.bf16 %v1870, %v1869
        %v1899 = vpack.c.bf16 %v1872, %v1871
        %v1900 = vpack.c.bf16 %v1874, %v1873
        %v1901 = vpack.c.bf16 %v1876, %v1875
        %v1902 = vpack.c.bf16 %v1878, %v1877
        %v1903 = vpack.c.bf16 %v1880, %v1879
        %v1904 = vpack.c.bf16 %v1882, %v1881
        %v1905 = vpack.c.bf16 %v1884, %v1883
        %v1906 = vpack.c.bf16 %v1886, %v1885
        %v1907 = vpack.c.bf16 %v1888, %v1887
        %v1908 = vpack.c.bf16 %v1890, %v1889
        %v1909 = vpack.c.bf16 %v1892, %v1891
        %v1910 = vpack.c.bf16 %v1894, %v1893
        %v1927 = vunpack.c.l.b16 %v1895
        %v1928 = vunpack.c.h.b16 %v1895
        %v1929 = vunpack.c.l.b16 %v1896
        %v1930 = vunpack.c.h.b16 %v1896
        %v1931 = vunpack.c.l.b16 %v1897
        %v1932 = vunpack.c.h.b16 %v1897
        %v1933 = vunpack.c.l.b16 %v1898
        %v1934 = vunpack.c.h.b16 %v1898
        %v1935 = vunpack.c.l.b16 %v1899
        %v1936 = vunpack.c.h.b16 %v1899
        %v1937 = vunpack.c.l.b16 %v1900
        %v1938 = vunpack.c.h.b16 %v1900
        %v1939 = vunpack.c.l.b16 %v1901
        %v1940 = vunpack.c.h.b16 %v1901
        %v1941 = vunpack.c.l.b16 %v1902
        %v1942 = vunpack.c.h.b16 %v1902
        %v1943 = vunpack.c.l.b16 %v1903
        %v1944 = vunpack.c.h.b16 %v1903
        %v1945 = vunpack.c.l.b16 %v1904
        %v1946 = vunpack.c.h.b16 %v1904
        %v1947 = vunpack.c.l.b16 %v1905
        %v1948 = vunpack.c.h.b16 %v1905
        %v1949 = vunpack.c.l.b16 %v1906
        %v1950 = vunpack.c.h.b16 %v1906
        %v1951 = vunpack.c.l.b16 %v1907
        %v1952 = vunpack.c.h.b16 %v1907
        %v1953 = vunpack.c.l.b16 %v1908
        %v1954 = vunpack.c.h.b16 %v1908
        %v1955 = vunpack.c.l.b16 %v1909
        %v1956 = vunpack.c.h.b16 %v1909
        %v1957 = vunpack.c.l.b16 %v1910
        %v1958 = vunpack.c.h.b16 %v1910
        %v1959 = vpack.c.b16 %v1927, %v1927
        %v1960 = vpack.c.b16 %v1928, %v1928
        %v1961 = vpack.c.b16 %v1929, %v1929
        %v1962 = vpack.c.b16 %v1930, %v1930
        %v1963 = vpack.c.b16 %v1931, %v1931
        %v1964 = vpack.c.b16 %v1932, %v1932
        %v1965 = vpack.c.b16 %v1933, %v1933
        %v1966 = vpack.c.b16 %v1934, %v1934
        %v1967 = vpack.c.b16 %v1935, %v1935
        %v1968 = vpack.c.b16 %v1936, %v1936
        %v1969 = vpack.c.b16 %v1937, %v1937
        %v1970 = vpack.c.b16 %v1938, %v1938
        %v1971 = vpack.c.b16 %v1939, %v1939
        %v1972 = vpack.c.b16 %v1940, %v1940
        %v1973 = vpack.c.b16 %v1941, %v1941
        %v1974 = vpack.c.b16 %v1942, %v1942
        %v1975 = vpack.c.b16 %v1943, %v1943
        %v1976 = vpack.c.b16 %v1944, %v1944
        %v1977 = vpack.c.b16 %v1945, %v1945
        %v1978 = vpack.c.b16 %v1946, %v1946
        %v1979 = vpack.c.b16 %v1947, %v1947
        %v1980 = vpack.c.b16 %v1948, %v1948
        %v1981 = vpack.c.b16 %v1949, %v1949
        %v1982 = vpack.c.b16 %v1950, %v1950
        %v1983 = vpack.c.b16 %v1951, %v1951
        %v1984 = vpack.c.b16 %v1952, %v1952
        %v1985 = vpack.c.b16 %v1953, %v1953
        %v1986 = vpack.c.b16 %v1954, %v1954
        %v1987 = vpack.c.b16 %v1955, %v1955
        %v1988 = vpack.c.b16 %v1956, %v1956
        %v1989 = vpack.c.b16 %v1957, %v1957
        %v1990 = vpack.c.b16 %v1958, %v1958
        %2023 = vst [vmem:[%s337] sm:$0xf] %v1959
        %2024 = vst [vmem:[%s337 + $0x4] sm:$0xf] %v1960
        %2025 = vst [vmem:[%s337 + $0x8] sm:$0xf] %v1961
        %2026 = vst [vmem:[%s337 + $0xc] sm:$0xf] %v1962
        %2027 = vst [vmem:[%s337 + $0x10] sm:$0xf] %v1963
        %2028 = vst [vmem:[%s337 + $0x14] sm:$0xf] %v1964
        %2029 = vst [vmem:[%s337 + $0x18] sm:$0xf] %v1965
        %2030 = vst [vmem:[%s337 + $0x1c] sm:$0xf] %v1966
        %2031 = vst [vmem:[%s337 + $0x20] sm:$0xf] %v1967
        %2032 = vst [vmem:[%s337 + $0x24] sm:$0xf] %v1968
        %2033 = vst [vmem:[%s337 + $0x28] sm:$0xf] %v1969
        %2034 = vst [vmem:[%s337 + $0x2c] sm:$0xf] %v1970
        %2035 = vst [vmem:[%s337 + $0x30] sm:$0xf] %v1971
        %2036 = vst [vmem:[%s337 + $0x34] sm:$0xf] %v1972
        %2037 = vst [vmem:[%s337 + $0x38] sm:$0xf] %v1973
        %2038 = vst [vmem:[%s337 + $0x3c] sm:$0xf] %v1974
        %2039 = vst [vmem:[%s337 + $0x40] sm:$0xf] %v1975
        %2040 = vst [vmem:[%s337 + $0x44] sm:$0xf] %v1976
        %2041 = vst [vmem:[%s337 + $0x48] sm:$0xf] %v1977
        %2042 = vst [vmem:[%s337 + $0x4c] sm:$0xf] %v1978
        %2043 = vst [vmem:[%s337 + $0x50] sm:$0xf] %v1979
        %2044 = vst [vmem:[%s337 + $0x54] sm:$0xf] %v1980
        %2045 = vst [vmem:[%s337 + $0x58] sm:$0xf] %v1981
        %2046 = vst [vmem:[%s337 + $0x5c] sm:$0xf] %v1982
        %2047 = vst [vmem:[%s337 + $0x60] sm:$0xf] %v1983
        %2048 = vst [vmem:[%s337 + $0x64] sm:$0xf] %v1984
        %2049 = vst [vmem:[%s337 + $0x68] sm:$0xf] %v1985
        %2050 = vst [vmem:[%s337 + $0x6c] sm:$0xf] %v1986
        %2051 = vst [vmem:[%s337 + $0x70] sm:$0xf] %v1987
        %2052 = vst [vmem:[%s337 + $0x74] sm:$0xf] %v1988
        %2053 = vst [vmem:[%s337 + $0x78] sm:$0xf] %v1989
        %2054 = vst [vmem:[%s337 + $0x7c] sm:$0xf] %v1990
        %s2055 = sand.u32 %s197, 1
        %s2056 = scalar_lea.sflag [#allocation4], %s2055
        %s2057 = sand.u32 %s197, 1
        %s2058 = smul.addr %s2057, 128
        %s2059 = scalar_lea.vmem [#allocation5], %s2058
        // Predicated region
        $region53: #{tpu_custom_call.1} parent=47 // pred_check
          %p2060 = pneg %p207
        $region54: #{tpu_custom_call.1} parent=47 // pred_check_branch
          %2062 = sbr.rel (%p2060) target = $region56
        $region55: #{tpu_custom_call.1} parent=47 // pred_region
          %s2063 = smul.u32 32, %s22
          %s2065 = ssub.s32 2048, 2048
          %2066 = vsyncadd %s2056, %s2065
          %s2067 = smul.addr %s2063, 64
          %s2068 = scalar_lea.hbm %s7, %s2067
          %s2069 = sshll.u32 %s2059, 4
          %s2070 = int_to_ptr.vmem [resolvable:$true] %s2069
          %2075 = dma.vmem_to_hbm [thread:$0]  %s2070, 2048, %s2068, %s2056, 64, 64, 4
        $region56: #{tpu_custom_call.1} parent=47 // pred_fallthru
          _
      $region48: #{tpu_custom_call.1} parent=5 // pred_fallthru
        _
      %p2076 = scmp.le.s32.totalorder 2, %s17
      // Predicated region
      $region57: #{tpu_custom_call.1} parent=5 // pred_check
        %p2077 = pneg %p2076
      $region58: #{tpu_custom_call.1} parent=5 // pred_check_branch
        %2079 = sbr.rel (%p2077) target = $region60
      $region59: #{tpu_custom_call.1} parent=5 // pred_region
        %s2080 = ssub.s32 %s17, 2
        // Predicated region
        $region61: #{tpu_custom_call.1} parent=59 // pred_check
          %p2081 = pneg %p213
        $region62: #{tpu_custom_call.1} parent=59 // pred_check_branch
          %2083 = sbr.rel (%p2081) target = $region64
        $region63: #{tpu_custom_call.1} parent=59 // pred_region
          %s2084 = sand.u32 %s198, 1
          %s2085 = scalar_lea.sflag [#allocation4], %s2084
          %s2086 = sand.u32 %s198, 1
          %s2087 = smul.addr %s2086, 128
          %s2088 = scalar_lea.vmem [#allocation5], %s2087
          %2089 = dma.done %s2085, 2048
        $region64: #{tpu_custom_call.1} parent=59 // pred_fallthru
          _
      $region60: #{tpu_custom_call.1} parent=5 // pred_fallthru
        _
    $region6: #{tpu_custom_call.1} parent=1 // loop_footer
      %s21 = sadd.s32 1, %s17
    $region7: #{tpu_custom_call.1} parent=1 // loop_footer_branch
      %16 = sbr.rel target = $region3
    $region8: #{tpu_custom_call.1} parent=1 // loop_exit
      _
    %2090 = vsyncpa [#allocation3], 1
    %s2091 = scalar_lea.sflag [#allocation3], 1
    %2092 = vsyncpa %s2091, 1
    %2093 = vsyncpa [#allocation4], 1
    %s2094 = scalar_lea.sflag [#allocation4], 1
    %2095 = vsyncpa %s2094, 1

</llo_original>
